<compile_context>
chip_gen: v6e
topology: v6e:2x2x1
jax: 0.10.0
libtpu: 0.0.40
codegen_flags: <defaults>
</compile_context>

<pallas_src>
import functools

import jax
import jax.numpy as jnp
from jax.experimental import pallas as pl
from jax.experimental.pallas import tpu as pltpu

C_IN = 16
C_OUT = 64
STRIDE = 8
H_IN, W_IN = 1024, 256              # -> conv out (1, 64, 128, 32), matches reshape target
H_OUT = (H_IN - 1) // STRIDE + 1    # 128
W_OUT = (W_IN - 1) // STRIDE + 1    # 32
N_COLS = H_OUT * W_OUT              # 4096


def _pick_tn() -> int:
    # v7x: 2 TensorCores/chip -> grid=4 ("parallel") gives each TC 2 steps so input
    # prefetch / output writeback still pipeline under compute.  v5e/v6e: single TC,
    # keep grid=2 so the ~0.35us/step overhead stays negligible vs per-step HBM time.
    try:
        kind = jax.devices()[0].device_kind.lower()
    except Exception:
        kind = ""
    return 1024 if "v7" in kind else 2048


def conv_gelu_kernel(w_ref, b_ref, x_ref, o_ref):
    # w_ref: (C_OUT, C_IN), b_ref: (C_OUT, 1), x_ref: (C_IN, TN), o_ref: (C_OUT, TN)
    v1 = jnp.dot(w_ref[...], x_ref[...], preferred_element_type=jnp.float32)
    v1 = v1 + b_ref[...]                                  # bias broadcast over columns
    inner = (v1 + (v1 * v1 * v1) * 0.044715) * 0.7978845608028654
    o_ref[...] = ((v1 * 0.5) * (jnp.tanh(inner) + 1.0)).astype(o_ref.dtype)


def conv_gelu_pallas(w, b, x_cols, tn):
    # w: (C_OUT, C_IN) f32, b: (C_OUT, 1) f32, x_cols: (C_IN, N_COLS) f32 (W-major cols)
    grid = (N_COLS // tn,)
    return pl.pallas_call(
        conv_gelu_kernel,
        out_shape=jax.ShapeDtypeStruct((C_OUT, N_COLS), jnp.float32),
        grid_spec=pltpu.PrefetchScalarGridSpec(
            num_scalar_prefetch=0,
            grid=grid,
            in_specs=[
                pl.BlockSpec((C_OUT, C_IN), lambda j: (0, 0)),   # weights: resident
                pl.BlockSpec((C_OUT, 1), lambda j: (0, 0)),      # bias: resident
                pl.BlockSpec((C_IN, tn), lambda j: (0, j)),
            ],
            out_specs=pl.BlockSpec((C_OUT, tn), lambda j: (0, j)),
        ),
        compiler_params=pltpu.CompilerParams(
            dimension_semantics=("parallel",),
            # Fuse the stride-8 subsample + W-major transpose producer into the
            # x_cols operand (no standalone gather launch / 256 KiB round-trip).
            allow_input_fusion=[False, False, True],
        ),
    )(w, b, x_cols)


def model_forward(x9, w, b, tn):
    # x9: (1, C_IN, H_IN, W_IN) NCHW.  1x1 conv with stride 8 == spatial subsample
    # + channel matmul.  Columns are laid out W-major (m = w*H_OUT + h) so the kernel
    # output already has the permute(0,1,3,2)+reshape layout.
    x_sub = x9[0, :, ::STRIDE, ::STRIDE]                              # (16, 128, 32)
    x_cols = jnp.transpose(x_sub, (0, 2, 1)).reshape(C_IN, N_COLS)    # (16, 4096) W-major
    out_flat = conv_gelu_pallas(w, b, x_cols, tn)                     # (64, 4096) conv+bias+GELU
    return out_flat.reshape(1, C_OUT, 128, 32)                        # free contiguous reshape


if __name__ == "__main__":
    key = jax.random.PRNGKey(0)
    kx, kw, kb = jax.random.split(key, 3)

    x9 = jax.random.normal(kx, (1, C_IN, H_IN, W_IN), dtype=jnp.float32)
    # Deterministic Conv2d(16, 64, 1) parameters (kaiming-uniform-ish scale).
    bound = 1.0 / (C_IN ** 0.5)
    w = jax.random.uniform(kw, (C_OUT, C_IN), jnp.float32, -bound, bound)
    b = jax.random.uniform(kb, (C_OUT, 1), jnp.float32, -bound, bound)

    TN = _pick_tn()
    fwd = jax.jit(functools.partial(model_forward, tn=TN))
    out = jax.block_until_ready(fwd(x9, w, b))

    # Pure-JAX reference mirroring the torch forward exactly:
    # conv -> permute(0,1,3,2) -> reshape -> tanh-GELU chain.
    x_cols_ref = x9[0, :, ::STRIDE, ::STRIDE].reshape(C_IN, N_COLS)
    v1 = (w @ x_cols_ref + b).reshape(1, C_OUT, H_OUT, W_OUT)
    v1 = jnp.transpose(v1, (0, 1, 3, 2)).reshape(1, C_OUT, 128, 32)
    ref = (v1 * 0.5) * (jnp.tanh((v1 + (v1 * v1 * v1) * 0.044715)
                                 * 0.7978845608028654) + 1.0)

    assert out.shape == (1, 64, 128, 32)
    assert jnp.allclose(out, ref, atol=1e-4, rtol=1e-4)

    print("KERNEL_OK")
</pallas_src>

<mosaic_0001>
module attributes {stable_mosaic.version = 11 : i64} {
  func.func @conv_gelu_kernel(%arg0: i32, %arg1: memref<64x16xf32, #tpu.memory_space<vmem>>, %arg2: memref<64x1xf32, #tpu.memory_space<vmem>>, %arg3: memref<16x2048xf32, #tpu.memory_space<vmem>>, %arg4: memref<64x2048xf32, #tpu.memory_space<vmem>>) attributes {dimension_semantics = [#tpu.dimension_semantics<parallel>], iteration_bounds = array<i64: 2>, scalar_prefetch = 0 : i64, scratch_operands = 0 : i64, tpu.core_type = #tpu.core_type<tc>, window_params = [{pipeline_mode = #tpu.pipeline_mode<synchronous>, transform_indices = @transform_0, window_bounds = array<i64: 64, 16>}, {pipeline_mode = #tpu.pipeline_mode<synchronous>, transform_indices = @transform_1, window_bounds = array<i64: 64, 1>}, {transform_indices = @transform_2, window_bounds = array<i64: 16, 2048>}, {transform_indices = @transform_3, window_bounds = array<i64: 64, 2048>}]} {
    %c0 = arith.constant 0 : index
    %c0_0 = arith.constant 0 : index
    %0 = vector.load %arg1[%c0, %c0_0] : memref<64x16xf32, #tpu.memory_space<vmem>>, vector<64x16xf32>
    %c0_1 = arith.constant 0 : index
    %c0_2 = arith.constant 0 : index
    %1 = vector.load %arg3[%c0_1, %c0_2] : memref<16x2048xf32, #tpu.memory_space<vmem>>, vector<16x2048xf32>
    %cst = arith.constant dense<0.000000e+00> : vector<64x2048xf32>
    %2 = tpu.matmul %0, %1, %cst {dimension_numbers = #tpu.dot_dimension_numbers<[1], [0], [0], [1], [0, 0, 1, 1], [], []>} : vector<64x16xf32>, vector<16x2048xf32>, vector<64x2048xf32> -> vector<64x2048xf32>
    %c0_3 = arith.constant 0 : index
    %c0_4 = arith.constant 0 : index
    %3 = vector.load %arg2[%c0_3, %c0_4] : memref<64x1xf32, #tpu.memory_space<vmem>>, vector<64x1xf32>
    %4 = vector.broadcast %3 : vector<64x1xf32> to vector<64x2048xf32>
    %5 = arith.addf %2, %4 : vector<64x2048xf32>
    %6 = arith.mulf %5, %5 : vector<64x2048xf32>
    %7 = arith.mulf %6, %5 : vector<64x2048xf32>
    %cst_5 = arith.constant 4.471500e-02 : f32
    %8 = vector.broadcast %cst_5 : f32 to vector<64x2048xf32>
    %9 = arith.mulf %7, %8 : vector<64x2048xf32>
    %10 = arith.addf %5, %9 : vector<64x2048xf32>
    %cst_6 = arith.constant 0.797884583 : f32
    %11 = vector.broadcast %cst_6 : f32 to vector<64x2048xf32>
    %12 = arith.mulf %10, %11 : vector<64x2048xf32>
    %cst_7 = arith.constant 5.000000e-01 : f32
    %13 = vector.broadcast %cst_7 : f32 to vector<64x2048xf32>
    %14 = arith.mulf %5, %13 : vector<64x2048xf32>
    %15 = math.tanh %12 : vector<64x2048xf32>
    %cst_8 = arith.constant 1.000000e+00 : f32
    %16 = vector.broadcast %cst_8 : f32 to vector<64x2048xf32>
    %17 = arith.addf %15, %16 : vector<64x2048xf32>
    %18 = arith.mulf %14, %17 : vector<64x2048xf32>
    %c0_9 = arith.constant 0 : index
    %c0_10 = arith.constant 0 : index
    %19 = vector.load %arg4[%c0_9, %c0_10] : memref<64x2048xf32, #tpu.memory_space<vmem>>, vector<64x2048xf32>
    tpu.vector_store %arg4[%c0_9, %c0_10], %18 {strides = array<i32>} : memref<64x2048xf32, #tpu.memory_space<vmem>>, vector<64x2048xf32>,
    return
  }
  func.func @transform_0(%arg0: i32) -> (i32, i32) {
    %c0_i32 = arith.constant 0 : i32
    %c0_i32_0 = arith.constant 0 : i32
    %c0_i32_1 = arith.constant 0 : i32
    return %c0_i32, %c0_i32_0 : i32, i32
  }
  func.func @transform_1(%arg0: i32) -> (i32, i32) {
    %c0_i32 = arith.constant 0 : i32
    %c0_i32_0 = arith.constant 0 : i32
    %c0_i32_1 = arith.constant 0 : i32
    return %c0_i32, %c0_i32_0 : i32, i32
  }
  func.func @transform_2(%arg0: i32) -> (i32, i32) {
    %c0_i32 = arith.constant 0 : i32
    %c0_i32_0 = arith.constant 0 : i32
    return %c0_i32, %arg0 : i32, i32
  }
  func.func @transform_3(%arg0: i32) -> (i32, i32) {
    %c0_i32 = arith.constant 0 : i32
    %c0_i32_0 = arith.constant 0 : i32
    return %c0_i32, %arg0 : i32, i32
  }
}

</mosaic_0001>

<llo_original>
// kernel: model_forward.2
$region0: #{model_forward.2}
  #allocation0 [shape = 'u32[]', space=smem, size = 0x4, offset = 0x4, fixed_abs, tag = 'smem constant byte address 0x4 - core index']
  #allocation1 [shape = 'u32[144,128]{1,0:T(1,128)}', space=vmem, size = 0x12000, scoped, tag = 'internal scratch']
  %s0 = inlined_call_operand.vmem [shape: f32[64,16], index: 0, kind: input, shape index: {}]
  %s1 = inlined_call_operand.vmem [shape: f32[64,1], index: 1, kind: input, shape index: {}]
  %s2 = inlined_call_operand.vmem [shape: f32[2,8,32,128], index: 2, kind: input, shape index: {}]
  %s3 = inlined_call_operand.vmem [shape: f32[64,4096], index: 3, kind: output, shape index: {}]
  %s4 = sld [smem:[#allocation0]]
  $region64: #{model_forward.2} parent=0
    _
  %s6 = ssub.s32 1, %s4
  %s7 = scalar_select 0, %s6, %s4
  $region1: #{model_forward.2} parent=0
    #allocation2 [shape = 'u8[1048576]{0}', space=vmem, size = 0x100000, scoped, tag = 'output window, operand 0']
    loop: start=0, step=1, limit=4
    $region2: #{model_forward.2} parent=1 // loop_pre_header
      _
    $region3: #{model_forward.2} parent=1 // loop_header
      %s9 = sphi 0, %s13
      %p10 = scmp.ge.s32.totalorder %s9, 4
      %s17 = sphi 0, %s17
      %s19 = sphi 0, %s17
      %s20 = sphi 0, %s19
      %s34 = sphi 0, %s20
      %s38 = sphi 0, %s38
      %s40 = sphi 0, %s38
      %s41 = sphi 0, %s40
      %s55 = sphi 0, %s41
      %s61 = sphi 0, %s63
      %s64 = sphi 0, %s61
      %s65 = sphi 0, %s64
      %s81 = sphi 0, %s65
      %s87 = sphi 0, %s89
      %s90 = sphi 0, %s87
      %s91 = sphi 0, %s90
      %s107 = sphi 0, %s91
    $region4: #{model_forward.2} parent=1 // loop_header_branch
      %12 = sbr.rel (%p10) target = $region8
    $region5: #{model_forward.2} parent=1 // loop_body
      %s14 = ssub.s32 %s9, 1
      %s15 = ssub.s32 %s9, 2
      %s16 = sadd.s32 %s9, 1
      %s18 = sadd.s32 %s17, 1
      %p21 = scmp.eq.s32.totalorder %s9, 1
      %p22 = scmp.ne.s32.totalorder %s17, %s19
      %p23 = scmp.eq.s32.totalorder %s9, 0
      %p24 = por %p22, %p23
      %p25 = scmp.ne.s32.totalorder %s17, %s19
      %p26 = scmp.eq.s32.totalorder %s14, 1
      %p27 = por %p25, %p26
      %p28 = scmp.ne.s32.totalorder %s19, %s20
      %p29 = scmp.eq.s32.totalorder %s14, 0
      %p30 = por %p28, %p29
      %p31 = scmp.ne.s32.totalorder %s19, %s20
      %p32 = scmp.eq.s32.totalorder %s15, 1
      %p33 = por %p31, %p32
      %p35 = scmp.ne.s32.totalorder %s20, %s34
      %p36 = scmp.eq.s32.totalorder %s15, 0
      %p37 = por %p35, %p36
      %s39 = sadd.s32 %s38, 1
      %p42 = scmp.eq.s32.totalorder %s9, 1
      %p43 = scmp.ne.s32.totalorder %s38, %s40
      %p44 = scmp.eq.s32.totalorder %s9, 0
      %p45 = por %p43, %p44
      %p46 = scmp.ne.s32.totalorder %s38, %s40
      %p47 = scmp.eq.s32.totalorder %s14, 1
      %p48 = por %p46, %p47
      %p49 = scmp.ne.s32.totalorder %s40, %s41
      %p50 = scmp.eq.s32.totalorder %s14, 0
      %p51 = por %p49, %p50
      %p52 = scmp.ne.s32.totalorder %s40, %s41
      %p53 = scmp.eq.s32.totalorder %s15, 1
      %p54 = por %p52, %p53
      %p56 = scmp.ne.s32.totalorder %s41, %s55
      %p57 = scmp.eq.s32.totalorder %s15, 0
      %p58 = por %p56, %p57
      %s59 = ssub.s32 %s9, %s16
      %p60 = scmp.eq.s32.totalorder %s59, 0
      %s62 = sadd.s32 %s61, 1
      %s63 = scalar_select %p60, %s61, %s62
      %p66 = pneg %p60
      %p67 = scmp.eq.s32.totalorder %s9, 1
      %p68 = por %p66, %p67
      %p69 = scmp.ne.s32.totalorder %s61, %s64
      %p70 = scmp.eq.s32.totalorder %s9, 0
      %p71 = por %p69, %p70
      %p72 = scmp.ne.s32.totalorder %s61, %s64
      %p73 = scmp.eq.s32.totalorder %s14, 1
      %p74 = por %p72, %p73
      %p75 = scmp.ne.s32.totalorder %s64, %s65
      %p76 = scmp.eq.s32.totalorder %s14, 0
      %p77 = por %p75, %p76
      %p78 = scmp.ne.s32.totalorder %s64, %s65
      %p79 = scmp.eq.s32.totalorder %s15, 1
      %p80 = por %p78, %p79
      %p82 = scmp.ne.s32.totalorder %s65, %s81
      %p83 = scmp.eq.s32.totalorder %s15, 0
      %p84 = por %p82, %p83
      %s85 = ssub.s32 %s9, %s16
      %p86 = scmp.eq.s32.totalorder %s85, 0
      %s88 = sadd.s32 %s87, 1
      %s89 = scalar_select %p86, %s87, %s88
      %p92 = pneg %p86
      %p93 = scmp.eq.s32.totalorder %s9, 1
      %p94 = por %p92, %p93
      %p95 = scmp.ne.s32.totalorder %s87, %s90
      %p96 = scmp.eq.s32.totalorder %s9, 0
      %p97 = por %p95, %p96
      %p98 = scmp.ne.s32.totalorder %s87, %s90
      %p99 = scmp.eq.s32.totalorder %s14, 1
      %p100 = por %p98, %p99
      %p101 = scmp.ne.s32.totalorder %s90, %s91
      %p102 = scmp.eq.s32.totalorder %s14, 0
      %p103 = por %p101, %p102
      %p104 = scmp.ne.s32.totalorder %s90, %s91
      %p105 = scmp.eq.s32.totalorder %s15, 1
      %p106 = por %p104, %p105
      %p108 = scmp.ne.s32.totalorder %s91, %s107
      %p109 = scmp.eq.s32.totalorder %s15, 0
      %p110 = por %p108, %p109
      %p111 = scmp.le.s32.totalorder 1, %s9
      %p112 = scmp.lt.s32.totalorder %s9, 3
      %p113 = pnand %p111, %p112
      %p114 = pneg %p113
      // Predicated region
      $region9: #{model_forward.2} parent=5 // pred_check
        _
      $region10: #{model_forward.2} parent=5 // pred_check_branch
        %116 = sbr.rel (%p113) target = $region12
      $region11: #{model_forward.2} parent=5 // pred_region
        %s117 = ssub.s32 %s9, 1
        // Predicated region
        $region13: #{model_forward.2} parent=11 // pred_check
          %p118 = pneg %p30
        $region14: #{model_forward.2} parent=11 // pred_check_branch
          %120 = sbr.rel (%p118) target = $region16
        $region15: #{model_forward.2} parent=11 // pred_region
          _
        $region16: #{model_forward.2} parent=11 // pred_fallthru
          _
        // Predicated region
        $region17: #{model_forward.2} parent=11 // pred_check
          %p121 = pneg %p51
        $region18: #{model_forward.2} parent=11 // pred_check_branch
          %123 = sbr.rel (%p121) target = $region20
        $region19: #{model_forward.2} parent=11 // pred_region
          _
        $region20: #{model_forward.2} parent=11 // pred_fallthru
          _
      $region12: #{model_forward.2} parent=5 // pred_fallthru
        _
      %p124 = scmp.lt.s32.totalorder %s9, 2
      // Predicated region
      $region21: #{model_forward.2} parent=5 // pred_check
        %p125 = pneg %p124
      $region22: #{model_forward.2} parent=5 // pred_check_branch
        %127 = sbr.rel (%p125) target = $region24
      $region23: #{model_forward.2} parent=5 // pred_region
        // Predicated region
        $region25: #{model_forward.2} parent=23 // pred_check
          %p128 = pneg %p71
        $region26: #{model_forward.2} parent=23 // pred_check_branch
          %130 = sbr.rel (%p128) target = $region28
        $region27: #{model_forward.2} parent=23 // pred_region
          %s131 = smul.u32 16, %s9
          %p132 = scmp.lt.s32.totalorder %s131, 31
          %s133 = scalar_select %p132, %s131, 31
          %s134 = smul.addr %s133, 8
          %s135 = scalar_lea.vmem %s2, %s134
          %s136 = smul.u32 16, %s9
        $region28: #{model_forward.2} parent=23 // pred_fallthru
          _
      $region24: #{model_forward.2} parent=5 // pred_fallthru
        _
      %p137 = scmp.le.s32.totalorder 1, %s9
      %p138 = scmp.lt.s32.totalorder %s9, 3
      %p139 = pnand %p137, %p138
      %p140 = pneg %p139
      // Predicated region
      $region29: #{model_forward.2} parent=5 // pred_check
        _
      $region30: #{model_forward.2} parent=5 // pred_check_branch
        %142 = sbr.rel (%p139) target = $region32
      $region31: #{model_forward.2} parent=5 // pred_region
        #allocation3 [shape = 'u8[131072]{0}', space=vmem, size = 0x20000, dematerialized = true, scoped, tag = 'FusionAdapter Buffer %fusion.1 = f32[16,4096]{1,0:T(8,128)} fusion(%param_2.1), kind=kLoop, calls=%fused_computation.1.clone, metadata={op_name="jit(model_forward)/reshape" stack_frame_id=8}']
        %s143 = ssub.s32 %s9, 1
        %p144 = pneg %p30
        %p145 = pneg %p27
        %p146 = pneg %p51
        %p147 = pneg %p48
        %s148 = smul.u32 16, %s14
        %p149 = scmp.lt.s32.totalorder %s148, 31
        %s150 = scalar_select %p149, %s148, 31
        %s151 = smul.addr %s150, 8
        %s152 = scalar_lea.vmem %s2, %s151
        %p153 = pneg %p77
        %p154 = pneg %p74
        %p155 = pneg %p103
        %p156 = pneg %p100
        %s157 = sand.u32 %s90, 1
        %s158 = sand.u32 %s90, 1
        %s159 = smul.addr %s158, 1024
        %s160 = scalar_lea.vmem [#allocation2], %s159
        %s161 = smul.u32 16, %s14
        %p162 = scmp.lt.s32.totalorder %s161, 31
        %s163 = scalar_select %p162, %s161, 31
        %s164 = smul.addr %s163, 8
        %s165 = scalar_lea.vmem %s2, %s164
        %s166 = smul.u32 16, %s14
        %s167 = smul.u32 16, %s14
        %v168 = vld [vmem:[%s165] sm:$0xff]
        %s170 = ssub.s32 256, 1
        %171 = vst [vmem:[#allocation3] sm:%s170] %v168
        %s172 = scalar_lea.vmem %s165, 8
        %v173 = vld [vmem:[%s172] sm:$0xff]
        %s174 = scalar_lea.vmem [#allocation3], 8
        %s176 = ssub.s32 256, 1
        %177 = vst [vmem:[%s174] sm:%s176] %v173
        %s178 = scalar_lea.vmem %s165, 16
        %v179 = vld [vmem:[%s178] sm:$0xff]
        %s180 = scalar_lea.vmem [#allocation3], 16
        %s182 = ssub.s32 256, 1
        %183 = vst [vmem:[%s180] sm:%s182] %v179
        %s184 = scalar_lea.vmem %s165, 24
        %v185 = vld [vmem:[%s184] sm:$0xff]
        %s186 = scalar_lea.vmem [#allocation3], 24
        %s188 = ssub.s32 256, 1
        %189 = vst [vmem:[%s186] sm:%s188] %v185
        %s190 = scalar_lea.vmem %s165, 32
        %v191 = vld [vmem:[%s190] sm:$0xff]
        %s192 = scalar_lea.vmem [#allocation3], 32
        %s194 = ssub.s32 256, 1
        %195 = vst [vmem:[%s192] sm:%s194] %v191
        %s196 = scalar_lea.vmem %s165, 40
        %v197 = vld [vmem:[%s196] sm:$0xff]
        %s198 = scalar_lea.vmem [#allocation3], 40
        %s200 = ssub.s32 256, 1
        %201 = vst [vmem:[%s198] sm:%s200] %v197
        %s202 = scalar_lea.vmem %s165, 48
        %v203 = vld [vmem:[%s202] sm:$0xff]
        %s204 = scalar_lea.vmem [#allocation3], 48
        %s206 = ssub.s32 256, 1
        %207 = vst [vmem:[%s204] sm:%s206] %v203
        %s208 = scalar_lea.vmem %s165, 56
        %v209 = vld [vmem:[%s208] sm:$0xff]
        %s210 = scalar_lea.vmem [#allocation3], 56
        %s212 = ssub.s32 256, 1
        %213 = vst [vmem:[%s210] sm:%s212] %v209
        %s214 = scalar_lea.vmem %s165, 64
        %v215 = vld [vmem:[%s214] sm:$0xff]
        %s216 = scalar_lea.vmem [#allocation3], 64
        %s218 = ssub.s32 256, 1
        %219 = vst [vmem:[%s216] sm:%s218] %v215
        %s220 = scalar_lea.vmem %s165, 72
        %v221 = vld [vmem:[%s220] sm:$0xff]
        %s222 = scalar_lea.vmem [#allocation3], 72
        %s224 = ssub.s32 256, 1
        %225 = vst [vmem:[%s222] sm:%s224] %v221
        %s226 = scalar_lea.vmem %s165, 80
        %v227 = vld [vmem:[%s226] sm:$0xff]
        %s228 = scalar_lea.vmem [#allocation3], 80
        %s230 = ssub.s32 256, 1
        %231 = vst [vmem:[%s228] sm:%s230] %v227
        %s232 = scalar_lea.vmem %s165, 88
        %v233 = vld [vmem:[%s232] sm:$0xff]
        %s234 = scalar_lea.vmem [#allocation3], 88
        %s236 = ssub.s32 256, 1
        %237 = vst [vmem:[%s234] sm:%s236] %v233
        %s238 = scalar_lea.vmem %s165, 96
        %v239 = vld [vmem:[%s238] sm:$0xff]
        %s240 = scalar_lea.vmem [#allocation3], 96
        %s242 = ssub.s32 256, 1
        %243 = vst [vmem:[%s240] sm:%s242] %v239
        %s244 = scalar_lea.vmem %s165, 104
        %v245 = vld [vmem:[%s244] sm:$0xff]
        %s246 = scalar_lea.vmem [#allocation3], 104
        %s248 = ssub.s32 256, 1
        %249 = vst [vmem:[%s246] sm:%s248] %v245
        %s250 = scalar_lea.vmem %s165, 112
        %v251 = vld [vmem:[%s250] sm:$0xff]
        %s252 = scalar_lea.vmem [#allocation3], 112
        %s254 = ssub.s32 256, 1
        %255 = vst [vmem:[%s252] sm:%s254] %v251
        %s256 = scalar_lea.vmem %s165, 120
        %v257 = vld [vmem:[%s256] sm:$0xff]
        %s258 = scalar_lea.vmem [#allocation3], 120
        %s260 = ssub.s32 256, 1
        %261 = vst [vmem:[%s258] sm:%s260] %v257
        %s262 = scalar_lea.vmem %s165, 256
        %v263 = vld [vmem:[%s262] sm:$0xff]
        %s264 = scalar_lea.vmem [#allocation3], 128
        %s266 = ssub.s32 256, 1
        %267 = vst [vmem:[%s264] sm:%s266] %v263
        %s268 = scalar_lea.vmem %s165, 264
        %v269 = vld [vmem:[%s268] sm:$0xff]
        %s270 = scalar_lea.vmem [#allocation3], 136
        %s272 = ssub.s32 256, 1
        %273 = vst [vmem:[%s270] sm:%s272] %v269
        %s274 = scalar_lea.vmem %s165, 272
        %v275 = vld [vmem:[%s274] sm:$0xff]
        %s276 = scalar_lea.vmem [#allocation3], 144
        %s278 = ssub.s32 256, 1
        %279 = vst [vmem:[%s276] sm:%s278] %v275
        %s280 = scalar_lea.vmem %s165, 280
        %v281 = vld [vmem:[%s280] sm:$0xff]
        %s282 = scalar_lea.vmem [#allocation3], 152
        %s284 = ssub.s32 256, 1
        %285 = vst [vmem:[%s282] sm:%s284] %v281
        %s286 = scalar_lea.vmem %s165, 288
        %v287 = vld [vmem:[%s286] sm:$0xff]
        %s288 = scalar_lea.vmem [#allocation3], 160
        %s290 = ssub.s32 256, 1
        %291 = vst [vmem:[%s288] sm:%s290] %v287
        %s292 = scalar_lea.vmem %s165, 296
        %v293 = vld [vmem:[%s292] sm:$0xff]
        %s294 = scalar_lea.vmem [#allocation3], 168
        %s296 = ssub.s32 256, 1
        %297 = vst [vmem:[%s294] sm:%s296] %v293
        %s298 = scalar_lea.vmem %s165, 304
        %v299 = vld [vmem:[%s298] sm:$0xff]
        %s300 = scalar_lea.vmem [#allocation3], 176
        %s302 = ssub.s32 256, 1
        %303 = vst [vmem:[%s300] sm:%s302] %v299
        %s304 = scalar_lea.vmem %s165, 312
        %v305 = vld [vmem:[%s304] sm:$0xff]
        %s306 = scalar_lea.vmem [#allocation3], 184
        %s308 = ssub.s32 256, 1
        %309 = vst [vmem:[%s306] sm:%s308] %v305
        %s310 = scalar_lea.vmem %s165, 320
        %v311 = vld [vmem:[%s310] sm:$0xff]
        %s312 = scalar_lea.vmem [#allocation3], 192
        %s314 = ssub.s32 256, 1
        %315 = vst [vmem:[%s312] sm:%s314] %v311
        %s316 = scalar_lea.vmem %s165, 328
        %v317 = vld [vmem:[%s316] sm:$0xff]
        %s318 = scalar_lea.vmem [#allocation3], 200
        %s320 = ssub.s32 256, 1
        %321 = vst [vmem:[%s318] sm:%s320] %v317
        %s322 = scalar_lea.vmem %s165, 336
        %v323 = vld [vmem:[%s322] sm:$0xff]
        %s324 = scalar_lea.vmem [#allocation3], 208
        %s326 = ssub.s32 256, 1
        %327 = vst [vmem:[%s324] sm:%s326] %v323
        %s328 = scalar_lea.vmem %s165, 344
        %v329 = vld [vmem:[%s328] sm:$0xff]
        %s330 = scalar_lea.vmem [#allocation3], 216
        %s332 = ssub.s32 256, 1
        %333 = vst [vmem:[%s330] sm:%s332] %v329
        %s334 = scalar_lea.vmem %s165, 352
        %v335 = vld [vmem:[%s334] sm:$0xff]
        %s336 = scalar_lea.vmem [#allocation3], 224
        %s338 = ssub.s32 256, 1
        %339 = vst [vmem:[%s336] sm:%s338] %v335
        %s340 = scalar_lea.vmem %s165, 360
        %v341 = vld [vmem:[%s340] sm:$0xff]
        %s342 = scalar_lea.vmem [#allocation3], 232
        %s344 = ssub.s32 256, 1
        %345 = vst [vmem:[%s342] sm:%s344] %v341
        %s346 = scalar_lea.vmem %s165, 368
        %v347 = vld [vmem:[%s346] sm:$0xff]
        %s348 = scalar_lea.vmem [#allocation3], 240
        %s350 = ssub.s32 256, 1
        %351 = vst [vmem:[%s348] sm:%s350] %v347
        %s352 = scalar_lea.vmem %s165, 376
        %v353 = vld [vmem:[%s352] sm:$0xff]
        %s354 = scalar_lea.vmem [#allocation3], 248
        %s356 = ssub.s32 256, 1
        %357 = vst [vmem:[%s354] sm:%s356] %v353
        %v358 = vld [vmem:[%s0] sm:$0xff]
        %v359 = vld [vmem:[%s0 + $0x8] sm:$0xff]
        %v360 = vld [vmem:[%s0 + $0x10] sm:$0xff]
        %v361 = vld [vmem:[%s0 + $0x18] sm:$0xff]
        %v362 = vld [vmem:[%s0 + $0x20] sm:$0xff]
        %v363 = vld [vmem:[%s0 + $0x28] sm:$0xff]
        %v364 = vld [vmem:[%s0 + $0x30] sm:$0xff]
        %v365 = vld [vmem:[%s0 + $0x38] sm:$0xff]
        %v366 = vld [vmem:[#allocation3] sm:$0xff]
        %v367 = vld [vmem:[#allocation3 + $0x8] sm:$0xff]
        %v368 = vld [vmem:[#allocation3 + $0x10] sm:$0xff]
        %v369 = vld [vmem:[#allocation3 + $0x18] sm:$0xff]
        %v370 = vld [vmem:[#allocation3 + $0x20] sm:$0xff]
        %v371 = vld [vmem:[#allocation3 + $0x28] sm:$0xff]
        %v372 = vld [vmem:[#allocation3 + $0x30] sm:$0xff]
        %v373 = vld [vmem:[#allocation3 + $0x38] sm:$0xff]
        %v374 = vld [vmem:[#allocation3 + $0x40] sm:$0xff]
        %v375 = vld [vmem:[#allocation3 + $0x48] sm:$0xff]
        %v376 = vld [vmem:[#allocation3 + $0x50] sm:$0xff]
        %v377 = vld [vmem:[#allocation3 + $0x58] sm:$0xff]
        %v378 = vld [vmem:[#allocation3 + $0x60] sm:$0xff]
        %v379 = vld [vmem:[#allocation3 + $0x68] sm:$0xff]
        %v380 = vld [vmem:[#allocation3 + $0x70] sm:$0xff]
        %v381 = vld [vmem:[#allocation3 + $0x78] sm:$0xff]
        %v382 = vld [vmem:[#allocation3 + $0x80] sm:$0xff]
        %v383 = vld [vmem:[#allocation3 + $0x88] sm:$0xff]
        %v384 = vld [vmem:[#allocation3 + $0x90] sm:$0xff]
        %v385 = vld [vmem:[#allocation3 + $0x98] sm:$0xff]
        %v386 = vld [vmem:[#allocation3 + $0xa0] sm:$0xff]
        %v387 = vld [vmem:[#allocation3 + $0xa8] sm:$0xff]
        %v388 = vld [vmem:[#allocation3 + $0xb0] sm:$0xff]
        %v389 = vld [vmem:[#allocation3 + $0xb8] sm:$0xff]
        %v390 = vld [vmem:[#allocation3 + $0xc0] sm:$0xff]
        %v391 = vld [vmem:[#allocation3 + $0xc8] sm:$0xff]
        %v392 = vld [vmem:[#allocation3 + $0xd0] sm:$0xff]
        %v393 = vld [vmem:[#allocation3 + $0xd8] sm:$0xff]
        %v394 = vld [vmem:[#allocation3 + $0xe0] sm:$0xff]
        %v395 = vld [vmem:[#allocation3 + $0xe8] sm:$0xff]
        %v396 = vld [vmem:[#allocation3 + $0xf0] sm:$0xff]
        %v397 = vld [vmem:[#allocation3 + $0xf8] sm:$0xff]
        %v398 = vld [vmem:[%s1] sm:$0xff]
        %v399 = vld [vmem:[%s1 + $0x8] sm:$0xff]
        %v400 = vld [vmem:[%s1 + $0x10] sm:$0xff]
        %v401 = vld [vmem:[%s1 + $0x18] sm:$0xff]
        %v402 = vld [vmem:[%s1 + $0x20] sm:$0xff]
        %v403 = vld [vmem:[%s1 + $0x28] sm:$0xff]
        %v404 = vld [vmem:[%s1 + $0x30] sm:$0xff]
        %v405 = vld [vmem:[%s1 + $0x38] sm:$0xff]
        %407 = vset.pattern.permute.xlu0 0
        %408 = vperm.xlu0 %407, %v398
        %v409 = vpop.permute.xlu0 %408
        %412 = vset.pattern.permute.xlu0 0
        %413 = vperm.xlu0 %412, %v399
        %v414 = vpop.permute.xlu0 %413
        %417 = vset.pattern.permute.xlu0 0
        %418 = vperm.xlu0 %417, %v400
        %v419 = vpop.permute.xlu0 %418
        %422 = vset.pattern.permute.xlu0 0
        %423 = vperm.xlu0 %422, %v401
        %v424 = vpop.permute.xlu0 %423
        %427 = vset.pattern.permute.xlu0 0
        %428 = vperm.xlu0 %427, %v402
        %v429 = vpop.permute.xlu0 %428
        %432 = vset.pattern.permute.xlu0 0
        %433 = vperm.xlu0 %432, %v403
        %v434 = vpop.permute.xlu0 %433
        %437 = vset.pattern.permute.xlu0 0
        %438 = vperm.xlu0 %437, %v404
        %v439 = vpop.permute.xlu0 %438
        %442 = vset.pattern.permute.xlu0 0
        %443 = vperm.xlu0 %442, %v405
        %v444 = vpop.permute.xlu0 %443
        %vm446 = vcmask 130048
        %v448 = vsel %vm446, %v358, 0
        %v451 = vsel %vm446, %v359, 0
        %v454 = vsel %vm446, %v360, 0
        %v457 = vsel %vm446, %v361, 0
        %v460 = vsel %vm446, %v362, 0
        %v463 = vsel %vm446, %v363, 0
        %v466 = vsel %vm446, %v364, 0
        %v469 = vsel %vm446, %v365, 0
        %471 = vmatprep.subr.mxu0 0.0
        %472 = vmatpush1.msra.mxu0 0.0
        %473 = vmatprep.subr.mxu0 0.0
        %474 = vmatpush1.msra.mxu0 0.0
        %475 = vmatprep.subr.mxu0 0.0
        %476 = vmatpush1.msra.mxu0 0.0
        %477 = vmatprep.subr.mxu0 0.0
        %478 = vmatpush1.msra.mxu0 0.0
        %479 = vmatprep.subr.mxu0 0.0
        %480 = vmatpush1.msra.mxu0 0.0
        %481 = vmatprep.subr.mxu0 0.0
        %482 = vmatpush1.msra.mxu0 0.0
        %483 = vmatprep.subr.mxu0 0.0
        %484 = vmatpush1.msra.mxu0 0.0
        %485 = vmatprep.subr.mxu0 0.0
        %486 = vmatpush1.msra.mxu0 0.0
        %487 = vmatprep.subr.mxu0 0.0
        %488 = vmatpush1.msra.mxu0 0.0
        %489 = vmatprep.subr.mxu0 0.0
        %490 = vmatpush1.msra.mxu0 0.0
        %491 = vmatprep.subr.mxu0 0.0
        %492 = vmatpush1.msra.mxu0 0.0
        %493 = vmatprep.subr.mxu0 0.0
        %494 = vmatpush1.msra.mxu0 0.0
        %495 = vmatprep.subr.mxu0 0.0
        %496 = vmatpush1.msra.mxu0 0.0
        %497 = vmatprep.subr.mxu0 0.0
        %498 = vmatpush1.msra.mxu0 0.0
        %499 = vmatprep.subr.mxu0 %v383
        %500 = vmatpush1.msra.mxu0 %v382
        %501 = vmatprep.subr.mxu0 %v367
        %502 = vmatpush1.msra.mxu0 %v366
        %503 = vmatprep.subr.mxu0 0.0
        %504 = vmatpush2.msra.mxu0 0.0
        %505 = vmatprep.subr.mxu0 0.0
        %506 = vmatpush2.msra.mxu0 0.0
        %507 = vmatprep.subr.mxu0 0.0
        %508 = vmatpush2.msra.mxu0 0.0
        %509 = vmatprep.subr.mxu0 0.0
        %510 = vmatpush2.msra.mxu0 0.0
        %511 = vmatprep.subr.mxu0 0.0
        %512 = vmatpush2.msra.mxu0 0.0
        %513 = vmatprep.subr.mxu0 0.0
        %514 = vmatpush2.msra.mxu0 0.0
        %515 = vmatprep.subr.mxu0 0.0
        %516 = vmatpush2.msra.mxu0 0.0
        %517 = vmatprep.subr.mxu0 0.0
        %518 = vmatpush2.msra.mxu0 0.0
        %519 = vmatprep.subr.mxu0 0.0
        %520 = vmatpush2.msra.mxu0 0.0
        %521 = vmatprep.subr.mxu0 0.0
        %522 = vmatpush2.msra.mxu0 0.0
        %523 = vmatprep.subr.mxu0 0.0
        %524 = vmatpush2.msra.mxu0 0.0
        %525 = vmatprep.subr.mxu0 0.0
        %526 = vmatpush2.msra.mxu0 0.0
        %527 = vmatprep.subr.mxu0 0.0
        %528 = vmatpush2.msra.mxu0 0.0
        %529 = vmatprep.subr.mxu0 0.0
        %530 = vmatpush2.msra.mxu0 0.0
        %531 = vmatprep.subr.mxu0 0.0
        %532 = vmatpush2.msra.mxu0 0.0
        %533 = vmatprep.subr.mxu0 0.0
        %534 = vmatpush2.msra.mxu0 0.0
        %535 = vmatprep.mubr.f32.mxu0 0.0
        %536 = vmatmul.mubr.f32.gmra.mxu0 %v448
        %v537 = vpop.f32.mrf.mxu0
        %v538 = vadd.f32 %v409, %v537
        %v539 = vpop.f32.mrf.mxu0
        %v540 = vadd.f32 %v409, %v539
        %541 = vmatprep.mubr.f32.mxu0 0.0
        %542 = vmatmul.mubr.f32.gmra.mxu0 %v451
        %v543 = vpop.f32.mrf.mxu0
        %v544 = vadd.f32 %v414, %v543
        %v545 = vpop.f32.mrf.mxu0
        %v546 = vadd.f32 %v414, %v545
        %547 = vmatprep.mubr.f32.mxu0 0.0
        %548 = vmatmul.mubr.f32.gmra.mxu0 %v454
        %v549 = vpop.f32.mrf.mxu0
        %v550 = vadd.f32 %v419, %v549
        %v551 = vpop.f32.mrf.mxu0
        %v552 = vadd.f32 %v419, %v551
        %553 = vmatprep.mubr.f32.mxu0 0.0
        %554 = vmatmul.mubr.f32.gmra.mxu0 %v457
        %v555 = vpop.f32.mrf.mxu0
        %v556 = vadd.f32 %v424, %v555
        %v557 = vpop.f32.mrf.mxu0
        %v558 = vadd.f32 %v424, %v557
        %559 = vmatprep.mubr.f32.mxu0 0.0
        %560 = vmatmul.mubr.f32.gmra.mxu0 %v460
        %v561 = vpop.f32.mrf.mxu0
        %v562 = vadd.f32 %v429, %v561
        %v563 = vpop.f32.mrf.mxu0
        %v564 = vadd.f32 %v429, %v563
        %565 = vmatprep.mubr.f32.mxu0 0.0
        %566 = vmatmul.mubr.f32.gmra.mxu0 %v463
        %v567 = vpop.f32.mrf.mxu0
        %v568 = vadd.f32 %v434, %v567
        %v569 = vpop.f32.mrf.mxu0
        %v570 = vadd.f32 %v434, %v569
        %571 = vmatprep.mubr.f32.mxu0 0.0
        %572 = vmatmul.mubr.f32.gmra.mxu0 %v466
        %v573 = vpop.f32.mrf.mxu0
        %v574 = vadd.f32 %v439, %v573
        %v575 = vpop.f32.mrf.mxu0
        %v576 = vadd.f32 %v439, %v575
        %577 = vmatprep.mubr.f32.mxu0 0.0
        %578 = vmatmul.mubr.f32.gmra.mxu0 %v469
        %v579 = vpop.f32.mrf.mxu0
        %v580 = vadd.f32 %v444, %v579
        %v581 = vpop.f32.mrf.mxu0
        %v582 = vadd.f32 %v444, %v581
        %583 = vdwg.mxu0
        %584 = vmatprep.subr.mxu0 0.0
        %585 = vmatpush1.msra.mxu0 0.0
        %586 = vmatprep.subr.mxu0 0.0
        %587 = vmatpush1.msra.mxu0 0.0
        %588 = vmatprep.subr.mxu0 0.0
        %589 = vmatpush1.msra.mxu0 0.0
        %590 = vmatprep.subr.mxu0 0.0
        %591 = vmatpush1.msra.mxu0 0.0
        %592 = vmatprep.subr.mxu0 0.0
        %593 = vmatpush1.msra.mxu0 0.0
        %594 = vmatprep.subr.mxu0 0.0
        %595 = vmatpush1.msra.mxu0 0.0
        %596 = vmatprep.subr.mxu0 0.0
        %597 = vmatpush1.msra.mxu0 0.0
        %598 = vmatprep.subr.mxu0 0.0
        %599 = vmatpush1.msra.mxu0 0.0
        %600 = vmatprep.subr.mxu0 0.0
        %601 = vmatpush1.msra.mxu0 0.0
        %602 = vmatprep.subr.mxu0 0.0
        %603 = vmatpush1.msra.mxu0 0.0
        %604 = vmatprep.subr.mxu0 0.0
        %605 = vmatpush1.msra.mxu0 0.0
        %606 = vmatprep.subr.mxu0 0.0
        %607 = vmatpush1.msra.mxu0 0.0
        %608 = vmatprep.subr.mxu0 0.0
        %609 = vmatpush1.msra.mxu0 0.0
        %610 = vmatprep.subr.mxu0 0.0
        %611 = vmatpush1.msra.mxu0 0.0
        %612 = vmatprep.subr.mxu0 %v385
        %613 = vmatpush1.msra.mxu0 %v384
        %614 = vmatprep.subr.mxu0 %v369
        %615 = vmatpush1.msra.mxu0 %v368
        %616 = vmatprep.subr.mxu0 0.0
        %617 = vmatpush2.msra.mxu0 0.0
        %618 = vmatprep.subr.mxu0 0.0
        %619 = vmatpush2.msra.mxu0 0.0
        %620 = vmatprep.subr.mxu0 0.0
        %621 = vmatpush2.msra.mxu0 0.0
        %622 = vmatprep.subr.mxu0 0.0
        %623 = vmatpush2.msra.mxu0 0.0
        %624 = vmatprep.subr.mxu0 0.0
        %625 = vmatpush2.msra.mxu0 0.0
        %626 = vmatprep.subr.mxu0 0.0
        %627 = vmatpush2.msra.mxu0 0.0
        %628 = vmatprep.subr.mxu0 0.0
        %629 = vmatpush2.msra.mxu0 0.0
        %630 = vmatprep.subr.mxu0 0.0
        %631 = vmatpush2.msra.mxu0 0.0
        %632 = vmatprep.subr.mxu0 0.0
        %633 = vmatpush2.msra.mxu0 0.0
        %634 = vmatprep.subr.mxu0 0.0
        %635 = vmatpush2.msra.mxu0 0.0
        %636 = vmatprep.subr.mxu0 0.0
        %637 = vmatpush2.msra.mxu0 0.0
        %638 = vmatprep.subr.mxu0 0.0
        %639 = vmatpush2.msra.mxu0 0.0
        %640 = vmatprep.subr.mxu0 0.0
        %641 = vmatpush2.msra.mxu0 0.0
        %642 = vmatprep.subr.mxu0 0.0
        %643 = vmatpush2.msra.mxu0 0.0
        %644 = vmatprep.subr.mxu0 0.0
        %645 = vmatpush2.msra.mxu0 0.0
        %646 = vmatprep.subr.mxu0 0.0
        %647 = vmatpush2.msra.mxu0 0.0
        %648 = vmatprep.mubr.f32.mxu0 0.0
        %649 = vmatmul.mubr.f32.gmra.mxu0 %v448
        %v650 = vpop.f32.mrf.mxu0
        %v651 = vadd.f32 %v409, %v650
        %v652 = vpop.f32.mrf.mxu0
        %v653 = vadd.f32 %v409, %v652
        %654 = vmatprep.mubr.f32.mxu0 0.0
        %655 = vmatmul.mubr.f32.gmra.mxu0 %v451
        %v656 = vpop.f32.mrf.mxu0
        %v657 = vadd.f32 %v414, %v656
        %v658 = vpop.f32.mrf.mxu0
        %v659 = vadd.f32 %v414, %v658
        %660 = vmatprep.mubr.f32.mxu0 0.0
        %661 = vmatmul.mubr.f32.gmra.mxu0 %v454
        %v662 = vpop.f32.mrf.mxu0
        %v663 = vadd.f32 %v419, %v662
        %v664 = vpop.f32.mrf.mxu0
        %v665 = vadd.f32 %v419, %v664
        %666 = vmatprep.mubr.f32.mxu0 0.0
        %667 = vmatmul.mubr.f32.gmra.mxu0 %v457
        %v668 = vpop.f32.mrf.mxu0
        %v669 = vadd.f32 %v424, %v668
        %v670 = vpop.f32.mrf.mxu0
        %v671 = vadd.f32 %v424, %v670
        %672 = vmatprep.mubr.f32.mxu0 0.0
        %673 = vmatmul.mubr.f32.gmra.mxu0 %v460
        %v674 = vpop.f32.mrf.mxu0
        %v675 = vadd.f32 %v429, %v674
        %v676 = vpop.f32.mrf.mxu0
        %v677 = vadd.f32 %v429, %v676
        %678 = vmatprep.mubr.f32.mxu0 0.0
        %679 = vmatmul.mubr.f32.gmra.mxu0 %v463
        %v680 = vpop.f32.mrf.mxu0
        %v681 = vadd.f32 %v434, %v680
        %v682 = vpop.f32.mrf.mxu0
        %v683 = vadd.f32 %v434, %v682
        %684 = vmatprep.mubr.f32.mxu0 0.0
        %685 = vmatmul.mubr.f32.gmra.mxu0 %v466
        %v686 = vpop.f32.mrf.mxu0
        %v687 = vadd.f32 %v439, %v686
        %v688 = vpop.f32.mrf.mxu0
        %v689 = vadd.f32 %v439, %v688
        %690 = vmatprep.mubr.f32.mxu0 0.0
        %691 = vmatmul.mubr.f32.gmra.mxu0 %v469
        %v692 = vpop.f32.mrf.mxu0
        %v693 = vadd.f32 %v444, %v692
        %v694 = vpop.f32.mrf.mxu0
        %v695 = vadd.f32 %v444, %v694
        %696 = vdwg.mxu0
        %697 = vmatprep.subr.mxu0 0.0
        %698 = vmatpush1.msra.mxu0 0.0
        %699 = vmatprep.subr.mxu0 0.0
        %700 = vmatpush1.msra.mxu0 0.0
        %701 = vmatprep.subr.mxu0 0.0
        %702 = vmatpush1.msra.mxu0 0.0
        %703 = vmatprep.subr.mxu0 0.0
        %704 = vmatpush1.msra.mxu0 0.0
        %705 = vmatprep.subr.mxu0 0.0
        %706 = vmatpush1.msra.mxu0 0.0
        %707 = vmatprep.subr.mxu0 0.0
        %708 = vmatpush1.msra.mxu0 0.0
        %709 = vmatprep.subr.mxu0 0.0
        %710 = vmatpush1.msra.mxu0 0.0
        %711 = vmatprep.subr.mxu0 0.0
        %712 = vmatpush1.msra.mxu0 0.0
        %713 = vmatprep.subr.mxu0 0.0
        %714 = vmatpush1.msra.mxu0 0.0
        %715 = vmatprep.subr.mxu0 0.0
        %716 = vmatpush1.msra.mxu0 0.0
        %717 = vmatprep.subr.mxu0 0.0
        %718 = vmatpush1.msra.mxu0 0.0
        %719 = vmatprep.subr.mxu0 0.0
        %720 = vmatpush1.msra.mxu0 0.0
        %721 = vmatprep.subr.mxu0 0.0
        %722 = vmatpush1.msra.mxu0 0.0
        %723 = vmatprep.subr.mxu0 0.0
        %724 = vmatpush1.msra.mxu0 0.0
        %725 = vmatprep.subr.mxu0 %v387
        %726 = vmatpush1.msra.mxu0 %v386
        %727 = vmatprep.subr.mxu0 %v371
        %728 = vmatpush1.msra.mxu0 %v370
        %729 = vmatprep.subr.mxu0 0.0
        %730 = vmatpush2.msra.mxu0 0.0
        %731 = vmatprep.subr.mxu0 0.0
        %732 = vmatpush2.msra.mxu0 0.0
        %733 = vmatprep.subr.mxu0 0.0
        %734 = vmatpush2.msra.mxu0 0.0
        %735 = vmatprep.subr.mxu0 0.0
        %736 = vmatpush2.msra.mxu0 0.0
        %737 = vmatprep.subr.mxu0 0.0
        %738 = vmatpush2.msra.mxu0 0.0
        %739 = vmatprep.subr.mxu0 0.0
        %740 = vmatpush2.msra.mxu0 0.0
        %741 = vmatprep.subr.mxu0 0.0
        %742 = vmatpush2.msra.mxu0 0.0
        %743 = vmatprep.subr.mxu0 0.0
        %744 = vmatpush2.msra.mxu0 0.0
        %745 = vmatprep.subr.mxu0 0.0
        %746 = vmatpush2.msra.mxu0 0.0
        %747 = vmatprep.subr.mxu0 0.0
        %748 = vmatpush2.msra.mxu0 0.0
        %749 = vmatprep.subr.mxu0 0.0
        %750 = vmatpush2.msra.mxu0 0.0
        %751 = vmatprep.subr.mxu0 0.0
        %752 = vmatpush2.msra.mxu0 0.0
        %753 = vmatprep.subr.mxu0 0.0
        %754 = vmatpush2.msra.mxu0 0.0
        %755 = vmatprep.subr.mxu0 0.0
        %756 = vmatpush2.msra.mxu0 0.0
        %757 = vmatprep.subr.mxu0 0.0
        %758 = vmatpush2.msra.mxu0 0.0
        %759 = vmatprep.subr.mxu0 0.0
        %760 = vmatpush2.msra.mxu0 0.0
        %761 = vmatprep.mubr.f32.mxu0 0.0
        %762 = vmatmul.mubr.f32.gmra.mxu0 %v448
        %v763 = vpop.f32.mrf.mxu0
        %v764 = vadd.f32 %v409, %v763
        %v765 = vpop.f32.mrf.mxu0
        %v766 = vadd.f32 %v409, %v765
        %767 = vmatprep.mubr.f32.mxu0 0.0
        %768 = vmatmul.mubr.f32.gmra.mxu0 %v451
        %v769 = vpop.f32.mrf.mxu0
        %v770 = vadd.f32 %v414, %v769
        %v771 = vpop.f32.mrf.mxu0
        %v772 = vadd.f32 %v414, %v771
        %773 = vmatprep.mubr.f32.mxu0 0.0
        %774 = vmatmul.mubr.f32.gmra.mxu0 %v454
        %v775 = vpop.f32.mrf.mxu0
        %v776 = vadd.f32 %v419, %v775
        %v777 = vpop.f32.mrf.mxu0
        %v778 = vadd.f32 %v419, %v777
        %779 = vmatprep.mubr.f32.mxu0 0.0
        %780 = vmatmul.mubr.f32.gmra.mxu0 %v457
        %v781 = vpop.f32.mrf.mxu0
        %v782 = vadd.f32 %v424, %v781
        %v783 = vpop.f32.mrf.mxu0
        %v784 = vadd.f32 %v424, %v783
        %785 = vmatprep.mubr.f32.mxu0 0.0
        %786 = vmatmul.mubr.f32.gmra.mxu0 %v460
        %v787 = vpop.f32.mrf.mxu0
        %v788 = vadd.f32 %v429, %v787
        %v789 = vpop.f32.mrf.mxu0
        %v790 = vadd.f32 %v429, %v789
        %791 = vmatprep.mubr.f32.mxu0 0.0
        %792 = vmatmul.mubr.f32.gmra.mxu0 %v463
        %v793 = vpop.f32.mrf.mxu0
        %v794 = vadd.f32 %v434, %v793
        %v795 = vpop.f32.mrf.mxu0
        %v796 = vadd.f32 %v434, %v795
        %797 = vmatprep.mubr.f32.mxu0 0.0
        %798 = vmatmul.mubr.f32.gmra.mxu0 %v466
        %v799 = vpop.f32.mrf.mxu0
        %v800 = vadd.f32 %v439, %v799
        %v801 = vpop.f32.mrf.mxu0
        %v802 = vadd.f32 %v439, %v801
        %803 = vmatprep.mubr.f32.mxu0 0.0
        %804 = vmatmul.mubr.f32.gmra.mxu0 %v469
        %v805 = vpop.f32.mrf.mxu0
        %v806 = vadd.f32 %v444, %v805
        %v807 = vpop.f32.mrf.mxu0
        %v808 = vadd.f32 %v444, %v807
        %809 = vdwg.mxu0
        %810 = vmatprep.subr.mxu0 0.0
        %811 = vmatpush1.msra.mxu0 0.0
        %812 = vmatprep.subr.mxu0 0.0
        %813 = vmatpush1.msra.mxu0 0.0
        %814 = vmatprep.subr.mxu0 0.0
        %815 = vmatpush1.msra.mxu0 0.0
        %816 = vmatprep.subr.mxu0 0.0
        %817 = vmatpush1.msra.mxu0 0.0
        %818 = vmatprep.subr.mxu0 0.0
        %819 = vmatpush1.msra.mxu0 0.0
        %820 = vmatprep.subr.mxu0 0.0
        %821 = vmatpush1.msra.mxu0 0.0
        %822 = vmatprep.subr.mxu0 0.0
        %823 = vmatpush1.msra.mxu0 0.0
        %824 = vmatprep.subr.mxu0 0.0
        %825 = vmatpush1.msra.mxu0 0.0
        %826 = vmatprep.subr.mxu0 0.0
        %827 = vmatpush1.msra.mxu0 0.0
        %828 = vmatprep.subr.mxu0 0.0
        %829 = vmatpush1.msra.mxu0 0.0
        %830 = vmatprep.subr.mxu0 0.0
        %831 = vmatpush1.msra.mxu0 0.0
        %832 = vmatprep.subr.mxu0 0.0
        %833 = vmatpush1.msra.mxu0 0.0
        %834 = vmatprep.subr.mxu0 0.0
        %835 = vmatpush1.msra.mxu0 0.0
        %836 = vmatprep.subr.mxu0 0.0
        %837 = vmatpush1.msra.mxu0 0.0
        %838 = vmatprep.subr.mxu0 %v389
        %839 = vmatpush1.msra.mxu0 %v388
        %840 = vmatprep.subr.mxu0 %v373
        %841 = vmatpush1.msra.mxu0 %v372
        %842 = vmatprep.subr.mxu0 0.0
        %843 = vmatpush2.msra.mxu0 0.0
        %844 = vmatprep.subr.mxu0 0.0
        %845 = vmatpush2.msra.mxu0 0.0
        %846 = vmatprep.subr.mxu0 0.0
        %847 = vmatpush2.msra.mxu0 0.0
        %848 = vmatprep.subr.mxu0 0.0
        %849 = vmatpush2.msra.mxu0 0.0
        %850 = vmatprep.subr.mxu0 0.0
        %851 = vmatpush2.msra.mxu0 0.0
        %852 = vmatprep.subr.mxu0 0.0
        %853 = vmatpush2.msra.mxu0 0.0
        %854 = vmatprep.subr.mxu0 0.0
        %855 = vmatpush2.msra.mxu0 0.0
        %856 = vmatprep.subr.mxu0 0.0
        %857 = vmatpush2.msra.mxu0 0.0
        %858 = vmatprep.subr.mxu0 0.0
        %859 = vmatpush2.msra.mxu0 0.0
        %860 = vmatprep.subr.mxu0 0.0
        %861 = vmatpush2.msra.mxu0 0.0
        %862 = vmatprep.subr.mxu0 0.0
        %863 = vmatpush2.msra.mxu0 0.0
        %864 = vmatprep.subr.mxu0 0.0
        %865 = vmatpush2.msra.mxu0 0.0
        %866 = vmatprep.subr.mxu0 0.0
        %867 = vmatpush2.msra.mxu0 0.0
        %868 = vmatprep.subr.mxu0 0.0
        %869 = vmatpush2.msra.mxu0 0.0
        %870 = vmatprep.subr.mxu0 0.0
        %871 = vmatpush2.msra.mxu0 0.0
        %872 = vmatprep.subr.mxu0 0.0
        %873 = vmatpush2.msra.mxu0 0.0
        %874 = vmatprep.mubr.f32.mxu0 0.0
        %875 = vmatmul.mubr.f32.gmra.mxu0 %v448
        %v876 = vpop.f32.mrf.mxu0
        %v877 = vadd.f32 %v409, %v876
        %v878 = vpop.f32.mrf.mxu0
        %v879 = vadd.f32 %v409, %v878
        %880 = vmatprep.mubr.f32.mxu0 0.0
        %881 = vmatmul.mubr.f32.gmra.mxu0 %v451
        %v882 = vpop.f32.mrf.mxu0
        %v883 = vadd.f32 %v414, %v882
        %v884 = vpop.f32.mrf.mxu0
        %v885 = vadd.f32 %v414, %v884
        %886 = vmatprep.mubr.f32.mxu0 0.0
        %887 = vmatmul.mubr.f32.gmra.mxu0 %v454
        %v888 = vpop.f32.mrf.mxu0
        %v889 = vadd.f32 %v419, %v888
        %v890 = vpop.f32.mrf.mxu0
        %v891 = vadd.f32 %v419, %v890
        %892 = vmatprep.mubr.f32.mxu0 0.0
        %893 = vmatmul.mubr.f32.gmra.mxu0 %v457
        %v894 = vpop.f32.mrf.mxu0
        %v895 = vadd.f32 %v424, %v894
        %v896 = vpop.f32.mrf.mxu0
        %v897 = vadd.f32 %v424, %v896
        %898 = vmatprep.mubr.f32.mxu0 0.0
        %899 = vmatmul.mubr.f32.gmra.mxu0 %v460
        %v900 = vpop.f32.mrf.mxu0
        %v901 = vadd.f32 %v429, %v900
        %v902 = vpop.f32.mrf.mxu0
        %v903 = vadd.f32 %v429, %v902
        %904 = vmatprep.mubr.f32.mxu0 0.0
        %905 = vmatmul.mubr.f32.gmra.mxu0 %v463
        %v906 = vpop.f32.mrf.mxu0
        %v907 = vadd.f32 %v434, %v906
        %v908 = vpop.f32.mrf.mxu0
        %v909 = vadd.f32 %v434, %v908
        %910 = vmatprep.mubr.f32.mxu0 0.0
        %911 = vmatmul.mubr.f32.gmra.mxu0 %v466
        %v912 = vpop.f32.mrf.mxu0
        %v913 = vadd.f32 %v439, %v912
        %v914 = vpop.f32.mrf.mxu0
        %v915 = vadd.f32 %v439, %v914
        %916 = vmatprep.mubr.f32.mxu0 0.0
        %917 = vmatmul.mubr.f32.gmra.mxu0 %v469
        %v918 = vpop.f32.mrf.mxu0
        %v919 = vadd.f32 %v444, %v918
        %v920 = vpop.f32.mrf.mxu0
        %v921 = vadd.f32 %v444, %v920
        %922 = vdwg.mxu0
        %923 = vmatprep.subr.mxu0 0.0
        %924 = vmatpush1.msra.mxu0 0.0
        %925 = vmatprep.subr.mxu0 0.0
        %926 = vmatpush1.msra.mxu0 0.0
        %927 = vmatprep.subr.mxu0 0.0
        %928 = vmatpush1.msra.mxu0 0.0
        %929 = vmatprep.subr.mxu0 0.0
        %930 = vmatpush1.msra.mxu0 0.0
        %931 = vmatprep.subr.mxu0 0.0
        %932 = vmatpush1.msra.mxu0 0.0
        %933 = vmatprep.subr.mxu0 0.0
        %934 = vmatpush1.msra.mxu0 0.0
        %935 = vmatprep.subr.mxu0 0.0
        %936 = vmatpush1.msra.mxu0 0.0
        %937 = vmatprep.subr.mxu0 0.0
        %938 = vmatpush1.msra.mxu0 0.0
        %939 = vmatprep.subr.mxu0 0.0
        %940 = vmatpush1.msra.mxu0 0.0
        %941 = vmatprep.subr.mxu0 0.0
        %942 = vmatpush1.msra.mxu0 0.0
        %943 = vmatprep.subr.mxu0 0.0
        %944 = vmatpush1.msra.mxu0 0.0
        %945 = vmatprep.subr.mxu0 0.0
        %946 = vmatpush1.msra.mxu0 0.0
        %947 = vmatprep.subr.mxu0 0.0
        %948 = vmatpush1.msra.mxu0 0.0
        %949 = vmatprep.subr.mxu0 0.0
        %950 = vmatpush1.msra.mxu0 0.0
        %951 = vmatprep.subr.mxu0 %v391
        %952 = vmatpush1.msra.mxu0 %v390
        %953 = vmatprep.subr.mxu0 %v375
        %954 = vmatpush1.msra.mxu0 %v374
        %955 = vmatprep.subr.mxu0 0.0
        %956 = vmatpush2.msra.mxu0 0.0
        %957 = vmatprep.subr.mxu0 0.0
        %958 = vmatpush2.msra.mxu0 0.0
        %959 = vmatprep.subr.mxu0 0.0
        %960 = vmatpush2.msra.mxu0 0.0
        %961 = vmatprep.subr.mxu0 0.0
        %962 = vmatpush2.msra.mxu0 0.0
        %963 = vmatprep.subr.mxu0 0.0
        %964 = vmatpush2.msra.mxu0 0.0
        %965 = vmatprep.subr.mxu0 0.0
        %966 = vmatpush2.msra.mxu0 0.0
        %967 = vmatprep.subr.mxu0 0.0
        %968 = vmatpush2.msra.mxu0 0.0
        %969 = vmatprep.subr.mxu0 0.0
        %970 = vmatpush2.msra.mxu0 0.0
        %971 = vmatprep.subr.mxu0 0.0
        %972 = vmatpush2.msra.mxu0 0.0
        %973 = vmatprep.subr.mxu0 0.0
        %974 = vmatpush2.msra.mxu0 0.0
        %975 = vmatprep.subr.mxu0 0.0
        %976 = vmatpush2.msra.mxu0 0.0
        %977 = vmatprep.subr.mxu0 0.0
        %978 = vmatpush2.msra.mxu0 0.0
        %979 = vmatprep.subr.mxu0 0.0
        %980 = vmatpush2.msra.mxu0 0.0
        %981 = vmatprep.subr.mxu0 0.0
        %982 = vmatpush2.msra.mxu0 0.0
        %983 = vmatprep.subr.mxu0 0.0
        %984 = vmatpush2.msra.mxu0 0.0
        %985 = vmatprep.subr.mxu0 0.0
        %986 = vmatpush2.msra.mxu0 0.0
        %987 = vmatprep.mubr.f32.mxu0 0.0
        %988 = vmatmul.mubr.f32.gmra.mxu0 %v448
        %v989 = vpop.f32.mrf.mxu0
        %v990 = vadd.f32 %v409, %v989
        %v991 = vpop.f32.mrf.mxu0
        %v992 = vadd.f32 %v409, %v991
        %993 = vmatprep.mubr.f32.mxu0 0.0
        %994 = vmatmul.mubr.f32.gmra.mxu0 %v451
        %v995 = vpop.f32.mrf.mxu0
        %v996 = vadd.f32 %v414, %v995
        %v997 = vpop.f32.mrf.mxu0
        %v998 = vadd.f32 %v414, %v997
        %999 = vmatprep.mubr.f32.mxu0 0.0
        %1000 = vmatmul.mubr.f32.gmra.mxu0 %v454
        %v1001 = vpop.f32.mrf.mxu0
        %v1002 = vadd.f32 %v419, %v1001
        %v1003 = vpop.f32.mrf.mxu0
        %v1004 = vadd.f32 %v419, %v1003
        %1005 = vmatprep.mubr.f32.mxu0 0.0
        %1006 = vmatmul.mubr.f32.gmra.mxu0 %v457
        %v1007 = vpop.f32.mrf.mxu0
        %v1008 = vadd.f32 %v424, %v1007
        %v1009 = vpop.f32.mrf.mxu0
        %v1010 = vadd.f32 %v424, %v1009
        %1011 = vmatprep.mubr.f32.mxu0 0.0
        %1012 = vmatmul.mubr.f32.gmra.mxu0 %v460
        %v1013 = vpop.f32.mrf.mxu0
        %v1014 = vadd.f32 %v429, %v1013
        %v1015 = vpop.f32.mrf.mxu0
        %v1016 = vadd.f32 %v429, %v1015
        %1017 = vmatprep.mubr.f32.mxu0 0.0
        %1018 = vmatmul.mubr.f32.gmra.mxu0 %v463
        %v1019 = vpop.f32.mrf.mxu0
        %v1020 = vadd.f32 %v434, %v1019
        %v1021 = vpop.f32.mrf.mxu0
        %v1022 = vadd.f32 %v434, %v1021
        %1023 = vmatprep.mubr.f32.mxu0 0.0
        %1024 = vmatmul.mubr.f32.gmra.mxu0 %v466
        %v1025 = vpop.f32.mrf.mxu0
        %v1026 = vadd.f32 %v439, %v1025
        %v1027 = vpop.f32.mrf.mxu0
        %v1028 = vadd.f32 %v439, %v1027
        %1029 = vmatprep.mubr.f32.mxu0 0.0
        %1030 = vmatmul.mubr.f32.gmra.mxu0 %v469
        %v1031 = vpop.f32.mrf.mxu0
        %v1032 = vadd.f32 %v444, %v1031
        %v1033 = vpop.f32.mrf.mxu0
        %v1034 = vadd.f32 %v444, %v1033
        %1035 = vdwg.mxu0
        %1036 = vmatprep.subr.mxu0 0.0
        %1037 = vmatpush1.msra.mxu0 0.0
        %1038 = vmatprep.subr.mxu0 0.0
        %1039 = vmatpush1.msra.mxu0 0.0
        %1040 = vmatprep.subr.mxu0 0.0
        %1041 = vmatpush1.msra.mxu0 0.0
        %1042 = vmatprep.subr.mxu0 0.0
        %1043 = vmatpush1.msra.mxu0 0.0
        %1044 = vmatprep.subr.mxu0 0.0
        %1045 = vmatpush1.msra.mxu0 0.0
        %1046 = vmatprep.subr.mxu0 0.0
        %1047 = vmatpush1.msra.mxu0 0.0
        %1048 = vmatprep.subr.mxu0 0.0
        %1049 = vmatpush1.msra.mxu0 0.0
        %1050 = vmatprep.subr.mxu0 0.0
        %1051 = vmatpush1.msra.mxu0 0.0
        %1052 = vmatprep.subr.mxu0 0.0
        %1053 = vmatpush1.msra.mxu0 0.0
        %1054 = vmatprep.subr.mxu0 0.0
        %1055 = vmatpush1.msra.mxu0 0.0
        %1056 = vmatprep.subr.mxu0 0.0
        %1057 = vmatpush1.msra.mxu0 0.0
        %1058 = vmatprep.subr.mxu0 0.0
        %1059 = vmatpush1.msra.mxu0 0.0
        %1060 = vmatprep.subr.mxu0 0.0
        %1061 = vmatpush1.msra.mxu0 0.0
        %1062 = vmatprep.subr.mxu0 0.0
        %1063 = vmatpush1.msra.mxu0 0.0
        %1064 = vmatprep.subr.mxu0 %v393
        %1065 = vmatpush1.msra.mxu0 %v392
        %1066 = vmatprep.subr.mxu0 %v377
        %1067 = vmatpush1.msra.mxu0 %v376
        %1068 = vmatprep.subr.mxu0 0.0
        %1069 = vmatpush2.msra.mxu0 0.0
        %1070 = vmatprep.subr.mxu0 0.0
        %1071 = vmatpush2.msra.mxu0 0.0
        %1072 = vmatprep.subr.mxu0 0.0
        %1073 = vmatpush2.msra.mxu0 0.0
        %1074 = vmatprep.subr.mxu0 0.0
        %1075 = vmatpush2.msra.mxu0 0.0
        %1076 = vmatprep.subr.mxu0 0.0
        %1077 = vmatpush2.msra.mxu0 0.0
        %1078 = vmatprep.subr.mxu0 0.0
        %1079 = vmatpush2.msra.mxu0 0.0
        %1080 = vmatprep.subr.mxu0 0.0
        %1081 = vmatpush2.msra.mxu0 0.0
        %1082 = vmatprep.subr.mxu0 0.0
        %1083 = vmatpush2.msra.mxu0 0.0
        %1084 = vmatprep.subr.mxu0 0.0
        %1085 = vmatpush2.msra.mxu0 0.0
        %1086 = vmatprep.subr.mxu0 0.0
        %1087 = vmatpush2.msra.mxu0 0.0
        %1088 = vmatprep.subr.mxu0 0.0
        %1089 = vmatpush2.msra.mxu0 0.0
        %1090 = vmatprep.subr.mxu0 0.0
        %1091 = vmatpush2.msra.mxu0 0.0
        %1092 = vmatprep.subr.mxu0 0.0
        %1093 = vmatpush2.msra.mxu0 0.0
        %1094 = vmatprep.subr.mxu0 0.0
        %1095 = vmatpush2.msra.mxu0 0.0
        %1096 = vmatprep.subr.mxu0 0.0
        %1097 = vmatpush2.msra.mxu0 0.0
        %1098 = vmatprep.subr.mxu0 0.0
        %1099 = vmatpush2.msra.mxu0 0.0
        %1100 = vmatprep.mubr.f32.mxu0 0.0
        %1101 = vmatmul.mubr.f32.gmra.mxu0 %v448
        %v1102 = vpop.f32.mrf.mxu0
        %v1103 = vadd.f32 %v409, %v1102
        %v1104 = vpop.f32.mrf.mxu0
        %v1105 = vadd.f32 %v409, %v1104
        %1106 = vmatprep.mubr.f32.mxu0 0.0
        %1107 = vmatmul.mubr.f32.gmra.mxu0 %v451
        %v1108 = vpop.f32.mrf.mxu0
        %v1109 = vadd.f32 %v414, %v1108
        %v1110 = vpop.f32.mrf.mxu0
        %v1111 = vadd.f32 %v414, %v1110
        %1112 = vmatprep.mubr.f32.mxu0 0.0
        %1113 = vmatmul.mubr.f32.gmra.mxu0 %v454
        %v1114 = vpop.f32.mrf.mxu0
        %v1115 = vadd.f32 %v419, %v1114
        %v1116 = vpop.f32.mrf.mxu0
        %v1117 = vadd.f32 %v419, %v1116
        %1118 = vmatprep.mubr.f32.mxu0 0.0
        %1119 = vmatmul.mubr.f32.gmra.mxu0 %v457
        %v1120 = vpop.f32.mrf.mxu0
        %v1121 = vadd.f32 %v424, %v1120
        %v1122 = vpop.f32.mrf.mxu0
        %v1123 = vadd.f32 %v424, %v1122
        %1124 = vmatprep.mubr.f32.mxu0 0.0
        %1125 = vmatmul.mubr.f32.gmra.mxu0 %v460
        %v1126 = vpop.f32.mrf.mxu0
        %v1127 = vadd.f32 %v429, %v1126
        %v1128 = vpop.f32.mrf.mxu0
        %v1129 = vadd.f32 %v429, %v1128
        %1130 = vmatprep.mubr.f32.mxu0 0.0
        %1131 = vmatmul.mubr.f32.gmra.mxu0 %v463
        %v1132 = vpop.f32.mrf.mxu0
        %v1133 = vadd.f32 %v434, %v1132
        %v1134 = vpop.f32.mrf.mxu0
        %v1135 = vadd.f32 %v434, %v1134
        %1136 = vmatprep.mubr.f32.mxu0 0.0
        %1137 = vmatmul.mubr.f32.gmra.mxu0 %v466
        %v1138 = vpop.f32.mrf.mxu0
        %v1139 = vadd.f32 %v439, %v1138
        %v1140 = vpop.f32.mrf.mxu0
        %v1141 = vadd.f32 %v439, %v1140
        %1142 = vmatprep.mubr.f32.mxu0 0.0
        %1143 = vmatmul.mubr.f32.gmra.mxu0 %v469
        %v1144 = vpop.f32.mrf.mxu0
        %v1145 = vadd.f32 %v444, %v1144
        %v1146 = vpop.f32.mrf.mxu0
        %v1147 = vadd.f32 %v444, %v1146
        %1148 = vdwg.mxu0
        %1149 = vmatprep.subr.mxu0 0.0
        %1150 = vmatpush1.msra.mxu0 0.0
        %1151 = vmatprep.subr.mxu0 0.0
        %1152 = vmatpush1.msra.mxu0 0.0
        %1153 = vmatprep.subr.mxu0 0.0
        %1154 = vmatpush1.msra.mxu0 0.0
        %1155 = vmatprep.subr.mxu0 0.0
        %1156 = vmatpush1.msra.mxu0 0.0
        %1157 = vmatprep.subr.mxu0 0.0
        %1158 = vmatpush1.msra.mxu0 0.0
        %1159 = vmatprep.subr.mxu0 0.0
        %1160 = vmatpush1.msra.mxu0 0.0
        %1161 = vmatprep.subr.mxu0 0.0
        %1162 = vmatpush1.msra.mxu0 0.0
        %1163 = vmatprep.subr.mxu0 0.0
        %1164 = vmatpush1.msra.mxu0 0.0
        %1165 = vmatprep.subr.mxu0 0.0
        %1166 = vmatpush1.msra.mxu0 0.0
        %1167 = vmatprep.subr.mxu0 0.0
        %1168 = vmatpush1.msra.mxu0 0.0
        %1169 = vmatprep.subr.mxu0 0.0
        %1170 = vmatpush1.msra.mxu0 0.0
        %1171 = vmatprep.subr.mxu0 0.0
        %1172 = vmatpush1.msra.mxu0 0.0
        %1173 = vmatprep.subr.mxu0 0.0
        %1174 = vmatpush1.msra.mxu0 0.0
        %1175 = vmatprep.subr.mxu0 0.0
        %1176 = vmatpush1.msra.mxu0 0.0
        %1177 = vmatprep.subr.mxu0 %v395
        %1178 = vmatpush1.msra.mxu0 %v394
        %1179 = vmatprep.subr.mxu0 %v379
        %1180 = vmatpush1.msra.mxu0 %v378
        %1181 = vmatprep.subr.mxu0 0.0
        %1182 = vmatpush2.msra.mxu0 0.0
        %1183 = vmatprep.subr.mxu0 0.0
        %1184 = vmatpush2.msra.mxu0 0.0
        %1185 = vmatprep.subr.mxu0 0.0
        %1186 = vmatpush2.msra.mxu0 0.0
        %1187 = vmatprep.subr.mxu0 0.0
        %1188 = vmatpush2.msra.mxu0 0.0
        %1189 = vmatprep.subr.mxu0 0.0
        %1190 = vmatpush2.msra.mxu0 0.0
        %1191 = vmatprep.subr.mxu0 0.0
        %1192 = vmatpush2.msra.mxu0 0.0
        %1193 = vmatprep.subr.mxu0 0.0
        %1194 = vmatpush2.msra.mxu0 0.0
        %1195 = vmatprep.subr.mxu0 0.0
        %1196 = vmatpush2.msra.mxu0 0.0
        %1197 = vmatprep.subr.mxu0 0.0
        %1198 = vmatpush2.msra.mxu0 0.0
        %1199 = vmatprep.subr.mxu0 0.0
        %1200 = vmatpush2.msra.mxu0 0.0
        %1201 = vmatprep.subr.mxu0 0.0
        %1202 = vmatpush2.msra.mxu0 0.0
        %1203 = vmatprep.subr.mxu0 0.0
        %1204 = vmatpush2.msra.mxu0 0.0
        %1205 = vmatprep.subr.mxu0 0.0
        %1206 = vmatpush2.msra.mxu0 0.0
        %1207 = vmatprep.subr.mxu0 0.0
        %1208 = vmatpush2.msra.mxu0 0.0
        %1209 = vmatprep.subr.mxu0 0.0
        %1210 = vmatpush2.msra.mxu0 0.0
        %1211 = vmatprep.subr.mxu0 0.0
        %1212 = vmatpush2.msra.mxu0 0.0
        %1213 = vmatprep.mubr.f32.mxu0 0.0
        %1214 = vmatmul.mubr.f32.gmra.mxu0 %v448
        %v1215 = vpop.f32.mrf.mxu0
        %v1216 = vadd.f32 %v409, %v1215
        %v1217 = vpop.f32.mrf.mxu0
        %v1218 = vadd.f32 %v409, %v1217
        %1219 = vmatprep.mubr.f32.mxu0 0.0
        %1220 = vmatmul.mubr.f32.gmra.mxu0 %v451
        %v1221 = vpop.f32.mrf.mxu0
        %v1222 = vadd.f32 %v414, %v1221
        %v1223 = vpop.f32.mrf.mxu0
        %v1224 = vadd.f32 %v414, %v1223
        %1225 = vmatprep.mubr.f32.mxu0 0.0
        %1226 = vmatmul.mubr.f32.gmra.mxu0 %v454
        %v1227 = vpop.f32.mrf.mxu0
        %v1228 = vadd.f32 %v419, %v1227
        %v1229 = vpop.f32.mrf.mxu0
        %v1230 = vadd.f32 %v419, %v1229
        %1231 = vmatprep.mubr.f32.mxu0 0.0
        %1232 = vmatmul.mubr.f32.gmra.mxu0 %v457
        %v1233 = vpop.f32.mrf.mxu0
        %v1234 = vadd.f32 %v424, %v1233
        %v1235 = vpop.f32.mrf.mxu0
        %v1236 = vadd.f32 %v424, %v1235
        %1237 = vmatprep.mubr.f32.mxu0 0.0
        %1238 = vmatmul.mubr.f32.gmra.mxu0 %v460
        %v1239 = vpop.f32.mrf.mxu0
        %v1240 = vadd.f32 %v429, %v1239
        %v1241 = vpop.f32.mrf.mxu0
        %v1242 = vadd.f32 %v429, %v1241
        %1243 = vmatprep.mubr.f32.mxu0 0.0
        %1244 = vmatmul.mubr.f32.gmra.mxu0 %v463
        %v1245 = vpop.f32.mrf.mxu0
        %v1246 = vadd.f32 %v434, %v1245
        %v1247 = vpop.f32.mrf.mxu0
        %v1248 = vadd.f32 %v434, %v1247
        %1249 = vmatprep.mubr.f32.mxu0 0.0
        %1250 = vmatmul.mubr.f32.gmra.mxu0 %v466
        %v1251 = vpop.f32.mrf.mxu0
        %v1252 = vadd.f32 %v439, %v1251
        %v1253 = vpop.f32.mrf.mxu0
        %v1254 = vadd.f32 %v439, %v1253
        %1255 = vmatprep.mubr.f32.mxu0 0.0
        %1256 = vmatmul.mubr.f32.gmra.mxu0 %v469
        %v1257 = vpop.f32.mrf.mxu0
        %v1258 = vadd.f32 %v444, %v1257
        %v1259 = vpop.f32.mrf.mxu0
        %v1260 = vadd.f32 %v444, %v1259
        %1261 = vdwg.mxu0
        %1262 = vmatprep.subr.mxu0 0.0
        %1263 = vmatpush1.msra.mxu0 0.0
        %1264 = vmatprep.subr.mxu0 0.0
        %1265 = vmatpush1.msra.mxu0 0.0
        %1266 = vmatprep.subr.mxu0 0.0
        %1267 = vmatpush1.msra.mxu0 0.0
        %1268 = vmatprep.subr.mxu0 0.0
        %1269 = vmatpush1.msra.mxu0 0.0
        %1270 = vmatprep.subr.mxu0 0.0
        %1271 = vmatpush1.msra.mxu0 0.0
        %1272 = vmatprep.subr.mxu0 0.0
        %1273 = vmatpush1.msra.mxu0 0.0
        %1274 = vmatprep.subr.mxu0 0.0
        %1275 = vmatpush1.msra.mxu0 0.0
        %1276 = vmatprep.subr.mxu0 0.0
        %1277 = vmatpush1.msra.mxu0 0.0
        %1278 = vmatprep.subr.mxu0 0.0
        %1279 = vmatpush1.msra.mxu0 0.0
        %1280 = vmatprep.subr.mxu0 0.0
        %1281 = vmatpush1.msra.mxu0 0.0
        %1282 = vmatprep.subr.mxu0 0.0
        %1283 = vmatpush1.msra.mxu0 0.0
        %1284 = vmatprep.subr.mxu0 0.0
        %1285 = vmatpush1.msra.mxu0 0.0
        %1286 = vmatprep.subr.mxu0 0.0
        %1287 = vmatpush1.msra.mxu0 0.0
        %1288 = vmatprep.subr.mxu0 0.0
        %1289 = vmatpush1.msra.mxu0 0.0
        %1290 = vmatprep.subr.mxu0 %v397
        %1291 = vmatpush1.msra.mxu0 %v396
        %1292 = vmatprep.subr.mxu0 %v381
        %1293 = vmatpush1.msra.mxu0 %v380
        %1294 = vmatprep.subr.mxu0 0.0
        %1295 = vmatpush2.msra.mxu0 0.0
        %1296 = vmatprep.subr.mxu0 0.0
        %1297 = vmatpush2.msra.mxu0 0.0
        %1298 = vmatprep.subr.mxu0 0.0
        %1299 = vmatpush2.msra.mxu0 0.0
        %1300 = vmatprep.subr.mxu0 0.0
        %1301 = vmatpush2.msra.mxu0 0.0
        %1302 = vmatprep.subr.mxu0 0.0
        %1303 = vmatpush2.msra.mxu0 0.0
        %1304 = vmatprep.subr.mxu0 0.0
        %1305 = vmatpush2.msra.mxu0 0.0
        %1306 = vmatprep.subr.mxu0 0.0
        %1307 = vmatpush2.msra.mxu0 0.0
        %1308 = vmatprep.subr.mxu0 0.0
        %1309 = vmatpush2.msra.mxu0 0.0
        %1310 = vmatprep.subr.mxu0 0.0
        %1311 = vmatpush2.msra.mxu0 0.0
        %1312 = vmatprep.subr.mxu0 0.0
        %1313 = vmatpush2.msra.mxu0 0.0
        %1314 = vmatprep.subr.mxu0 0.0
        %1315 = vmatpush2.msra.mxu0 0.0
        %1316 = vmatprep.subr.mxu0 0.0
        %1317 = vmatpush2.msra.mxu0 0.0
        %1318 = vmatprep.subr.mxu0 0.0
        %1319 = vmatpush2.msra.mxu0 0.0
        %1320 = vmatprep.subr.mxu0 0.0
        %1321 = vmatpush2.msra.mxu0 0.0
        %1322 = vmatprep.subr.mxu0 0.0
        %1323 = vmatpush2.msra.mxu0 0.0
        %1324 = vmatprep.subr.mxu0 0.0
        %1325 = vmatpush2.msra.mxu0 0.0
        %1326 = vmatprep.mubr.f32.mxu0 0.0
        %1327 = vmatmul.mubr.f32.gmra.mxu0 %v448
        %v1328 = vpop.f32.mrf.mxu0
        %v1329 = vadd.f32 %v409, %v1328
        %v1330 = vpop.f32.mrf.mxu0
        %v1331 = vadd.f32 %v409, %v1330
        %1332 = vmatprep.mubr.f32.mxu0 0.0
        %1333 = vmatmul.mubr.f32.gmra.mxu0 %v451
        %v1334 = vpop.f32.mrf.mxu0
        %v1335 = vadd.f32 %v414, %v1334
        %v1336 = vpop.f32.mrf.mxu0
        %v1337 = vadd.f32 %v414, %v1336
        %1338 = vmatprep.mubr.f32.mxu0 0.0
        %1339 = vmatmul.mubr.f32.gmra.mxu0 %v454
        %v1340 = vpop.f32.mrf.mxu0
        %v1341 = vadd.f32 %v419, %v1340
        %v1342 = vpop.f32.mrf.mxu0
        %v1343 = vadd.f32 %v419, %v1342
        %1344 = vmatprep.mubr.f32.mxu0 0.0
        %1345 = vmatmul.mubr.f32.gmra.mxu0 %v457
        %v1346 = vpop.f32.mrf.mxu0
        %v1347 = vadd.f32 %v424, %v1346
        %v1348 = vpop.f32.mrf.mxu0
        %v1349 = vadd.f32 %v424, %v1348
        %1350 = vmatprep.mubr.f32.mxu0 0.0
        %1351 = vmatmul.mubr.f32.gmra.mxu0 %v460
        %v1352 = vpop.f32.mrf.mxu0
        %v1353 = vadd.f32 %v429, %v1352
        %v1354 = vpop.f32.mrf.mxu0
        %v1355 = vadd.f32 %v429, %v1354
        %1356 = vmatprep.mubr.f32.mxu0 0.0
        %1357 = vmatmul.mubr.f32.gmra.mxu0 %v463
        %v1358 = vpop.f32.mrf.mxu0
        %v1359 = vadd.f32 %v434, %v1358
        %v1360 = vpop.f32.mrf.mxu0
        %v1361 = vadd.f32 %v434, %v1360
        %1362 = vmatprep.mubr.f32.mxu0 0.0
        %1363 = vmatmul.mubr.f32.gmra.mxu0 %v466
        %v1364 = vpop.f32.mrf.mxu0
        %v1365 = vadd.f32 %v439, %v1364
        %v1366 = vpop.f32.mrf.mxu0
        %v1367 = vadd.f32 %v439, %v1366
        %1368 = vmatprep.mubr.f32.mxu0 0.0
        %1369 = vmatmul.mubr.f32.gmra.mxu0 %v469
        %v1370 = vpop.f32.mrf.mxu0
        %v1371 = vadd.f32 %v444, %v1370
        %v1372 = vpop.f32.mrf.mxu0
        %v1373 = vadd.f32 %v444, %v1372
        %1374 = vdwg.mxu0
        %v1375 = vmul.f32 %v538, %v538
        %v1376 = vmul.f32 %v540, %v540
        %v1377 = vmul.f32 %v651, %v651
        %v1378 = vmul.f32 %v653, %v653
        %v1379 = vmul.f32 %v764, %v764
        %v1380 = vmul.f32 %v766, %v766
        %v1381 = vmul.f32 %v877, %v877
        %v1382 = vmul.f32 %v879, %v879
        %v1383 = vmul.f32 %v990, %v990
        %v1384 = vmul.f32 %v992, %v992
        %v1385 = vmul.f32 %v1103, %v1103
        %v1386 = vmul.f32 %v1105, %v1105
        %v1387 = vmul.f32 %v1216, %v1216
        %v1388 = vmul.f32 %v1218, %v1218
        %v1389 = vmul.f32 %v1329, %v1329
        %v1390 = vmul.f32 %v1331, %v1331
        %v1391 = vmul.f32 %v544, %v544
        %v1392 = vmul.f32 %v546, %v546
        %v1393 = vmul.f32 %v657, %v657
        %v1394 = vmul.f32 %v659, %v659
        %v1395 = vmul.f32 %v770, %v770
        %v1396 = vmul.f32 %v772, %v772
        %v1397 = vmul.f32 %v883, %v883
        %v1398 = vmul.f32 %v885, %v885
        %v1399 = vmul.f32 %v996, %v996
        %v1400 = vmul.f32 %v998, %v998
        %v1401 = vmul.f32 %v1109, %v1109
        %v1402 = vmul.f32 %v1111, %v1111
        %v1403 = vmul.f32 %v1222, %v1222
        %v1404 = vmul.f32 %v1224, %v1224
        %v1405 = vmul.f32 %v1335, %v1335
        %v1406 = vmul.f32 %v1337, %v1337
        %v1407 = vmul.f32 %v550, %v550
        %v1408 = vmul.f32 %v552, %v552
        %v1409 = vmul.f32 %v663, %v663
        %v1410 = vmul.f32 %v665, %v665
        %v1411 = vmul.f32 %v776, %v776
        %v1412 = vmul.f32 %v778, %v778
        %v1413 = vmul.f32 %v889, %v889
        %v1414 = vmul.f32 %v891, %v891
        %v1415 = vmul.f32 %v1002, %v1002
        %v1416 = vmul.f32 %v1004, %v1004
        %v1417 = vmul.f32 %v1115, %v1115
        %v1418 = vmul.f32 %v1117, %v1117
        %v1419 = vmul.f32 %v1228, %v1228
        %v1420 = vmul.f32 %v1230, %v1230
        %v1421 = vmul.f32 %v1341, %v1341
        %v1422 = vmul.f32 %v1343, %v1343
        %v1423 = vmul.f32 %v556, %v556
        %v1424 = vmul.f32 %v558, %v558
        %v1425 = vmul.f32 %v669, %v669
        %v1426 = vmul.f32 %v671, %v671
        %v1427 = vmul.f32 %v782, %v782
        %v1428 = vmul.f32 %v784, %v784
        %v1429 = vmul.f32 %v895, %v895
        %v1430 = vmul.f32 %v897, %v897
        %v1431 = vmul.f32 %v1008, %v1008
        %v1432 = vmul.f32 %v1010, %v1010
        %v1433 = vmul.f32 %v1121, %v1121
        %v1434 = vmul.f32 %v1123, %v1123
        %v1435 = vmul.f32 %v1234, %v1234
        %v1436 = vmul.f32 %v1236, %v1236
        %v1437 = vmul.f32 %v1347, %v1347
        %v1438 = vmul.f32 %v1349, %v1349
        %v1439 = vmul.f32 %v562, %v562
        %v1440 = vmul.f32 %v564, %v564
        %v1441 = vmul.f32 %v675, %v675
        %v1442 = vmul.f32 %v677, %v677
        %v1443 = vmul.f32 %v788, %v788
        %v1444 = vmul.f32 %v790, %v790
        %v1445 = vmul.f32 %v901, %v901
        %v1446 = vmul.f32 %v903, %v903
        %v1447 = vmul.f32 %v1014, %v1014
        %v1448 = vmul.f32 %v1016, %v1016
        %v1449 = vmul.f32 %v1127, %v1127
        %v1450 = vmul.f32 %v1129, %v1129
        %v1451 = vmul.f32 %v1240, %v1240
        %v1452 = vmul.f32 %v1242, %v1242
        %v1453 = vmul.f32 %v1353, %v1353
        %v1454 = vmul.f32 %v1355, %v1355
        %v1455 = vmul.f32 %v568, %v568
        %v1456 = vmul.f32 %v570, %v570
        %v1457 = vmul.f32 %v681, %v681
        %v1458 = vmul.f32 %v683, %v683
        %v1459 = vmul.f32 %v794, %v794
        %v1460 = vmul.f32 %v796, %v796
        %v1461 = vmul.f32 %v907, %v907
        %v1462 = vmul.f32 %v909, %v909
        %v1463 = vmul.f32 %v1020, %v1020
        %v1464 = vmul.f32 %v1022, %v1022
        %v1465 = vmul.f32 %v1133, %v1133
        %v1466 = vmul.f32 %v1135, %v1135
        %v1467 = vmul.f32 %v1246, %v1246
        %v1468 = vmul.f32 %v1248, %v1248
        %v1469 = vmul.f32 %v1359, %v1359
        %v1470 = vmul.f32 %v1361, %v1361
        %v1471 = vmul.f32 %v574, %v574
        %v1472 = vmul.f32 %v576, %v576
        %v1473 = vmul.f32 %v687, %v687
        %v1474 = vmul.f32 %v689, %v689
        %v1475 = vmul.f32 %v800, %v800
        %v1476 = vmul.f32 %v802, %v802
        %v1477 = vmul.f32 %v913, %v913
        %v1478 = vmul.f32 %v915, %v915
        %v1479 = vmul.f32 %v1026, %v1026
        %v1480 = vmul.f32 %v1028, %v1028
        %v1481 = vmul.f32 %v1139, %v1139
        %v1482 = vmul.f32 %v1141, %v1141
        %v1483 = vmul.f32 %v1252, %v1252
        %v1484 = vmul.f32 %v1254, %v1254
        %v1485 = vmul.f32 %v1365, %v1365
        %v1486 = vmul.f32 %v1367, %v1367
        %v1487 = vmul.f32 %v580, %v580
        %v1488 = vmul.f32 %v582, %v582
        %v1489 = vmul.f32 %v693, %v693
        %v1490 = vmul.f32 %v695, %v695
        %v1491 = vmul.f32 %v806, %v806
        %v1492 = vmul.f32 %v808, %v808
        %v1493 = vmul.f32 %v919, %v919
        %v1494 = vmul.f32 %v921, %v921
        %v1495 = vmul.f32 %v1032, %v1032
        %v1496 = vmul.f32 %v1034, %v1034
        %v1497 = vmul.f32 %v1145, %v1145
        %v1498 = vmul.f32 %v1147, %v1147
        %v1499 = vmul.f32 %v1258, %v1258
        %v1500 = vmul.f32 %v1260, %v1260
        %v1501 = vmul.f32 %v1371, %v1371
        %v1502 = vmul.f32 %v1373, %v1373
        %v1503 = vmul.f32 %v1375, %v538
        %v1504 = vmul.f32 %v1376, %v540
        %v1505 = vmul.f32 %v1377, %v651
        %v1506 = vmul.f32 %v1378, %v653
        %v1507 = vmul.f32 %v1379, %v764
        %v1508 = vmul.f32 %v1380, %v766
        %v1509 = vmul.f32 %v1381, %v877
        %v1510 = vmul.f32 %v1382, %v879
        %v1511 = vmul.f32 %v1383, %v990
        %v1512 = vmul.f32 %v1384, %v992
        %v1513 = vmul.f32 %v1385, %v1103
        %v1514 = vmul.f32 %v1386, %v1105
        %v1515 = vmul.f32 %v1387, %v1216
        %v1516 = vmul.f32 %v1388, %v1218
        %v1517 = vmul.f32 %v1389, %v1329
        %v1518 = vmul.f32 %v1390, %v1331
        %v1519 = vmul.f32 %v1391, %v544
        %v1520 = vmul.f32 %v1392, %v546
        %v1521 = vmul.f32 %v1393, %v657
        %v1522 = vmul.f32 %v1394, %v659
        %v1523 = vmul.f32 %v1395, %v770
        %v1524 = vmul.f32 %v1396, %v772
        %v1525 = vmul.f32 %v1397, %v883
        %v1526 = vmul.f32 %v1398, %v885
        %v1527 = vmul.f32 %v1399, %v996
        %v1528 = vmul.f32 %v1400, %v998
        %v1529 = vmul.f32 %v1401, %v1109
        %v1530 = vmul.f32 %v1402, %v1111
        %v1531 = vmul.f32 %v1403, %v1222
        %v1532 = vmul.f32 %v1404, %v1224
        %v1533 = vmul.f32 %v1405, %v1335
        %v1534 = vmul.f32 %v1406, %v1337
        %v1535 = vmul.f32 %v1407, %v550
        %v1536 = vmul.f32 %v1408, %v552
        %v1537 = vmul.f32 %v1409, %v663
        %v1538 = vmul.f32 %v1410, %v665
        %v1539 = vmul.f32 %v1411, %v776
        %v1540 = vmul.f32 %v1412, %v778
        %v1541 = vmul.f32 %v1413, %v889
        %v1542 = vmul.f32 %v1414, %v891
        %v1543 = vmul.f32 %v1415, %v1002
        %v1544 = vmul.f32 %v1416, %v1004
        %v1545 = vmul.f32 %v1417, %v1115
        %v1546 = vmul.f32 %v1418, %v1117
        %v1547 = vmul.f32 %v1419, %v1228
        %v1548 = vmul.f32 %v1420, %v1230
        %v1549 = vmul.f32 %v1421, %v1341
        %v1550 = vmul.f32 %v1422, %v1343
        %v1551 = vmul.f32 %v1423, %v556
        %v1552 = vmul.f32 %v1424, %v558
        %v1553 = vmul.f32 %v1425, %v669
        %v1554 = vmul.f32 %v1426, %v671
        %v1555 = vmul.f32 %v1427, %v782
        %v1556 = vmul.f32 %v1428, %v784
        %v1557 = vmul.f32 %v1429, %v895
        %v1558 = vmul.f32 %v1430, %v897
        %v1559 = vmul.f32 %v1431, %v1008
        %v1560 = vmul.f32 %v1432, %v1010
        %v1561 = vmul.f32 %v1433, %v1121
        %v1562 = vmul.f32 %v1434, %v1123
        %v1563 = vmul.f32 %v1435, %v1234
        %v1564 = vmul.f32 %v1436, %v1236
        %v1565 = vmul.f32 %v1437, %v1347
        %v1566 = vmul.f32 %v1438, %v1349
        %v1567 = vmul.f32 %v1439, %v562
        %v1568 = vmul.f32 %v1440, %v564
        %v1569 = vmul.f32 %v1441, %v675
        %v1570 = vmul.f32 %v1442, %v677
        %v1571 = vmul.f32 %v1443, %v788
        %v1572 = vmul.f32 %v1444, %v790
        %v1573 = vmul.f32 %v1445, %v901
        %v1574 = vmul.f32 %v1446, %v903
        %v1575 = vmul.f32 %v1447, %v1014
        %v1576 = vmul.f32 %v1448, %v1016
        %v1577 = vmul.f32 %v1449, %v1127
        %v1578 = vmul.f32 %v1450, %v1129
        %v1579 = vmul.f32 %v1451, %v1240
        %v1580 = vmul.f32 %v1452, %v1242
        %v1581 = vmul.f32 %v1453, %v1353
        %v1582 = vmul.f32 %v1454, %v1355
        %v1583 = vmul.f32 %v1455, %v568
        %v1584 = vmul.f32 %v1456, %v570
        %v1585 = vmul.f32 %v1457, %v681
        %v1586 = vmul.f32 %v1458, %v683
        %v1587 = vmul.f32 %v1459, %v794
        %v1588 = vmul.f32 %v1460, %v796
        %v1589 = vmul.f32 %v1461, %v907
        %v1590 = vmul.f32 %v1462, %v909
        %v1591 = vmul.f32 %v1463, %v1020
        %v1592 = vmul.f32 %v1464, %v1022
        %v1593 = vmul.f32 %v1465, %v1133
        %v1594 = vmul.f32 %v1466, %v1135
        %v1595 = vmul.f32 %v1467, %v1246
        %v1596 = vmul.f32 %v1468, %v1248
        %v1597 = vmul.f32 %v1469, %v1359
        %v1598 = vmul.f32 %v1470, %v1361
        %v1599 = vmul.f32 %v1471, %v574
        %v1600 = vmul.f32 %v1472, %v576
        %v1601 = vmul.f32 %v1473, %v687
        %v1602 = vmul.f32 %v1474, %v689
        %v1603 = vmul.f32 %v1475, %v800
        %v1604 = vmul.f32 %v1476, %v802
        %v1605 = vmul.f32 %v1477, %v913
        %v1606 = vmul.f32 %v1478, %v915
        %v1607 = vmul.f32 %v1479, %v1026
        %v1608 = vmul.f32 %v1480, %v1028
        %v1609 = vmul.f32 %v1481, %v1139
        %v1610 = vmul.f32 %v1482, %v1141
        %v1611 = vmul.f32 %v1483, %v1252
        %v1612 = vmul.f32 %v1484, %v1254
        %v1613 = vmul.f32 %v1485, %v1365
        %v1614 = vmul.f32 %v1486, %v1367
        %v1615 = vmul.f32 %v1487, %v580
        %v1616 = vmul.f32 %v1488, %v582
        %v1617 = vmul.f32 %v1489, %v693
        %v1618 = vmul.f32 %v1490, %v695
        %v1619 = vmul.f32 %v1491, %v806
        %v1620 = vmul.f32 %v1492, %v808
        %v1621 = vmul.f32 %v1493, %v919
        %v1622 = vmul.f32 %v1494, %v921
        %v1623 = vmul.f32 %v1495, %v1032
        %v1624 = vmul.f32 %v1496, %v1034
        %v1625 = vmul.f32 %v1497, %v1145
        %v1626 = vmul.f32 %v1498, %v1147
        %v1627 = vmul.f32 %v1499, %v1258
        %v1628 = vmul.f32 %v1500, %v1260
        %v1629 = vmul.f32 %v1501, %v1371
        %v1630 = vmul.f32 %v1502, %v1373
        %v1631 = vmul.f32 %v1503, 0.044715
        %v1632 = vmul.f32 %v1504, 0.044715
        %v1633 = vmul.f32 %v1505, 0.044715
        %v1634 = vmul.f32 %v1506, 0.044715
        %v1635 = vmul.f32 %v1507, 0.044715
        %v1636 = vmul.f32 %v1508, 0.044715
        %v1637 = vmul.f32 %v1509, 0.044715
        %v1638 = vmul.f32 %v1510, 0.044715
        %v1639 = vmul.f32 %v1511, 0.044715
        %v1640 = vmul.f32 %v1512, 0.044715
        %v1641 = vmul.f32 %v1513, 0.044715
        %v1642 = vmul.f32 %v1514, 0.044715
        %v1643 = vmul.f32 %v1515, 0.044715
        %v1644 = vmul.f32 %v1516, 0.044715
        %v1645 = vmul.f32 %v1517, 0.044715
        %v1646 = vmul.f32 %v1518, 0.044715
        %v1647 = vmul.f32 %v1519, 0.044715
        %v1648 = vmul.f32 %v1520, 0.044715
        %v1649 = vmul.f32 %v1521, 0.044715
        %v1650 = vmul.f32 %v1522, 0.044715
        %v1651 = vmul.f32 %v1523, 0.044715
        %v1652 = vmul.f32 %v1524, 0.044715
        %v1653 = vmul.f32 %v1525, 0.044715
        %v1654 = vmul.f32 %v1526, 0.044715
        %v1655 = vmul.f32 %v1527, 0.044715
        %v1656 = vmul.f32 %v1528, 0.044715
        %v1657 = vmul.f32 %v1529, 0.044715
        %v1658 = vmul.f32 %v1530, 0.044715
        %v1659 = vmul.f32 %v1531, 0.044715
        %v1660 = vmul.f32 %v1532, 0.044715
        %v1661 = vmul.f32 %v1533, 0.044715
        %v1662 = vmul.f32 %v1534, 0.044715
        %v1663 = vmul.f32 %v1535, 0.044715
        %v1664 = vmul.f32 %v1536, 0.044715
        %v1665 = vmul.f32 %v1537, 0.044715
        %v1666 = vmul.f32 %v1538, 0.044715
        %v1667 = vmul.f32 %v1539, 0.044715
        %v1668 = vmul.f32 %v1540, 0.044715
        %v1669 = vmul.f32 %v1541, 0.044715
        %v1670 = vmul.f32 %v1542, 0.044715
        %v1671 = vmul.f32 %v1543, 0.044715
        %v1672 = vmul.f32 %v1544, 0.044715
        %v1673 = vmul.f32 %v1545, 0.044715
        %v1674 = vmul.f32 %v1546, 0.044715
        %v1675 = vmul.f32 %v1547, 0.044715
        %v1676 = vmul.f32 %v1548, 0.044715
        %v1677 = vmul.f32 %v1549, 0.044715
        %v1678 = vmul.f32 %v1550, 0.044715
        %v1679 = vmul.f32 %v1551, 0.044715
        %v1680 = vmul.f32 %v1552, 0.044715
        %v1681 = vmul.f32 %v1553, 0.044715
        %v1682 = vmul.f32 %v1554, 0.044715
        %v1683 = vmul.f32 %v1555, 0.044715
        %v1684 = vmul.f32 %v1556, 0.044715
        %v1685 = vmul.f32 %v1557, 0.044715
        %v1686 = vmul.f32 %v1558, 0.044715
        %v1687 = vmul.f32 %v1559, 0.044715
        %v1688 = vmul.f32 %v1560, 0.044715
        %v1689 = vmul.f32 %v1561, 0.044715
        %v1690 = vmul.f32 %v1562, 0.044715
        %v1691 = vmul.f32 %v1563, 0.044715
        %v1692 = vmul.f32 %v1564, 0.044715
        %v1693 = vmul.f32 %v1565, 0.044715
        %v1694 = vmul.f32 %v1566, 0.044715
        %v1695 = vmul.f32 %v1567, 0.044715
        %v1696 = vmul.f32 %v1568, 0.044715
        %v1697 = vmul.f32 %v1569, 0.044715
        %v1698 = vmul.f32 %v1570, 0.044715
        %v1699 = vmul.f32 %v1571, 0.044715
        %v1700 = vmul.f32 %v1572, 0.044715
        %v1701 = vmul.f32 %v1573, 0.044715
        %v1702 = vmul.f32 %v1574, 0.044715
        %v1703 = vmul.f32 %v1575, 0.044715
        %v1704 = vmul.f32 %v1576, 0.044715
        %v1705 = vmul.f32 %v1577, 0.044715
        %v1706 = vmul.f32 %v1578, 0.044715
        %v1707 = vmul.f32 %v1579, 0.044715
        %v1708 = vmul.f32 %v1580, 0.044715
        %v1709 = vmul.f32 %v1581, 0.044715
        %v1710 = vmul.f32 %v1582, 0.044715
        %v1711 = vmul.f32 %v1583, 0.044715
        %v1712 = vmul.f32 %v1584, 0.044715
        %v1713 = vmul.f32 %v1585, 0.044715
        %v1714 = vmul.f32 %v1586, 0.044715
        %v1715 = vmul.f32 %v1587, 0.044715
        %v1716 = vmul.f32 %v1588, 0.044715
        %v1717 = vmul.f32 %v1589, 0.044715
        %v1718 = vmul.f32 %v1590, 0.044715
        %v1719 = vmul.f32 %v1591, 0.044715
        %v1720 = vmul.f32 %v1592, 0.044715
        %v1721 = vmul.f32 %v1593, 0.044715
        %v1722 = vmul.f32 %v1594, 0.044715
        %v1723 = vmul.f32 %v1595, 0.044715
        %v1724 = vmul.f32 %v1596, 0.044715
        %v1725 = vmul.f32 %v1597, 0.044715
        %v1726 = vmul.f32 %v1598, 0.044715
        %v1727 = vmul.f32 %v1599, 0.044715
        %v1728 = vmul.f32 %v1600, 0.044715
        %v1729 = vmul.f32 %v1601, 0.044715
        %v1730 = vmul.f32 %v1602, 0.044715
        %v1731 = vmul.f32 %v1603, 0.044715
        %v1732 = vmul.f32 %v1604, 0.044715
        %v1733 = vmul.f32 %v1605, 0.044715
        %v1734 = vmul.f32 %v1606, 0.044715
        %v1735 = vmul.f32 %v1607, 0.044715
        %v1736 = vmul.f32 %v1608, 0.044715
        %v1737 = vmul.f32 %v1609, 0.044715
        %v1738 = vmul.f32 %v1610, 0.044715
        %v1739 = vmul.f32 %v1611, 0.044715
        %v1740 = vmul.f32 %v1612, 0.044715
        %v1741 = vmul.f32 %v1613, 0.044715
        %v1742 = vmul.f32 %v1614, 0.044715
        %v1743 = vmul.f32 %v1615, 0.044715
        %v1744 = vmul.f32 %v1616, 0.044715
        %v1745 = vmul.f32 %v1617, 0.044715
        %v1746 = vmul.f32 %v1618, 0.044715
        %v1747 = vmul.f32 %v1619, 0.044715
        %v1748 = vmul.f32 %v1620, 0.044715
        %v1749 = vmul.f32 %v1621, 0.044715
        %v1750 = vmul.f32 %v1622, 0.044715
        %v1751 = vmul.f32 %v1623, 0.044715
        %v1752 = vmul.f32 %v1624, 0.044715
        %v1753 = vmul.f32 %v1625, 0.044715
        %v1754 = vmul.f32 %v1626, 0.044715
        %v1755 = vmul.f32 %v1627, 0.044715
        %v1756 = vmul.f32 %v1628, 0.044715
        %v1757 = vmul.f32 %v1629, 0.044715
        %v1758 = vmul.f32 %v1630, 0.044715
        %v1759 = vadd.f32 %v538, %v1631
        %v1760 = vadd.f32 %v540, %v1632
        %v1761 = vadd.f32 %v651, %v1633
        %v1762 = vadd.f32 %v653, %v1634
        %v1763 = vadd.f32 %v764, %v1635
        %v1764 = vadd.f32 %v766, %v1636
        %v1765 = vadd.f32 %v877, %v1637
        %v1766 = vadd.f32 %v879, %v1638
        %v1767 = vadd.f32 %v990, %v1639
        %v1768 = vadd.f32 %v992, %v1640
        %v1769 = vadd.f32 %v1103, %v1641
        %v1770 = vadd.f32 %v1105, %v1642
        %v1771 = vadd.f32 %v1216, %v1643
        %v1772 = vadd.f32 %v1218, %v1644
        %v1773 = vadd.f32 %v1329, %v1645
        %v1774 = vadd.f32 %v1331, %v1646
        %v1775 = vadd.f32 %v544, %v1647
        %v1776 = vadd.f32 %v546, %v1648
        %v1777 = vadd.f32 %v657, %v1649
        %v1778 = vadd.f32 %v659, %v1650
        %v1779 = vadd.f32 %v770, %v1651
        %v1780 = vadd.f32 %v772, %v1652
        %v1781 = vadd.f32 %v883, %v1653
        %v1782 = vadd.f32 %v885, %v1654
        %v1783 = vadd.f32 %v996, %v1655
        %v1784 = vadd.f32 %v998, %v1656
        %v1785 = vadd.f32 %v1109, %v1657
        %v1786 = vadd.f32 %v1111, %v1658
        %v1787 = vadd.f32 %v1222, %v1659
        %v1788 = vadd.f32 %v1224, %v1660
        %v1789 = vadd.f32 %v1335, %v1661
        %v1790 = vadd.f32 %v1337, %v1662
        %v1791 = vadd.f32 %v550, %v1663
        %v1792 = vadd.f32 %v552, %v1664
        %v1793 = vadd.f32 %v663, %v1665
        %v1794 = vadd.f32 %v665, %v1666
        %v1795 = vadd.f32 %v776, %v1667
        %v1796 = vadd.f32 %v778, %v1668
        %v1797 = vadd.f32 %v889, %v1669
        %v1798 = vadd.f32 %v891, %v1670
        %v1799 = vadd.f32 %v1002, %v1671
        %v1800 = vadd.f32 %v1004, %v1672
        %v1801 = vadd.f32 %v1115, %v1673
        %v1802 = vadd.f32 %v1117, %v1674
        %v1803 = vadd.f32 %v1228, %v1675
        %v1804 = vadd.f32 %v1230, %v1676
        %v1805 = vadd.f32 %v1341, %v1677
        %v1806 = vadd.f32 %v1343, %v1678
        %v1807 = vadd.f32 %v556, %v1679
        %v1808 = vadd.f32 %v558, %v1680
        %v1809 = vadd.f32 %v669, %v1681
        %v1810 = vadd.f32 %v671, %v1682
        %v1811 = vadd.f32 %v782, %v1683
        %v1812 = vadd.f32 %v784, %v1684
        %v1813 = vadd.f32 %v895, %v1685
        %v1814 = vadd.f32 %v897, %v1686
        %v1815 = vadd.f32 %v1008, %v1687
        %v1816 = vadd.f32 %v1010, %v1688
        %v1817 = vadd.f32 %v1121, %v1689
        %v1818 = vadd.f32 %v1123, %v1690
        %v1819 = vadd.f32 %v1234, %v1691
        %v1820 = vadd.f32 %v1236, %v1692
        %v1821 = vadd.f32 %v1347, %v1693
        %v1822 = vadd.f32 %v1349, %v1694
        %v1823 = vadd.f32 %v562, %v1695
        %v1824 = vadd.f32 %v564, %v1696
        %v1825 = vadd.f32 %v675, %v1697
        %v1826 = vadd.f32 %v677, %v1698
        %v1827 = vadd.f32 %v788, %v1699
        %v1828 = vadd.f32 %v790, %v1700
        %v1829 = vadd.f32 %v901, %v1701
        %v1830 = vadd.f32 %v903, %v1702
        %v1831 = vadd.f32 %v1014, %v1703
        %v1832 = vadd.f32 %v1016, %v1704
        %v1833 = vadd.f32 %v1127, %v1705
        %v1834 = vadd.f32 %v1129, %v1706
        %v1835 = vadd.f32 %v1240, %v1707
        %v1836 = vadd.f32 %v1242, %v1708
        %v1837 = vadd.f32 %v1353, %v1709
        %v1838 = vadd.f32 %v1355, %v1710
        %v1839 = vadd.f32 %v568, %v1711
        %v1840 = vadd.f32 %v570, %v1712
        %v1841 = vadd.f32 %v681, %v1713
        %v1842 = vadd.f32 %v683, %v1714
        %v1843 = vadd.f32 %v794, %v1715
        %v1844 = vadd.f32 %v796, %v1716
        %v1845 = vadd.f32 %v907, %v1717
        %v1846 = vadd.f32 %v909, %v1718
        %v1847 = vadd.f32 %v1020, %v1719
        %v1848 = vadd.f32 %v1022, %v1720
        %v1849 = vadd.f32 %v1133, %v1721
        %v1850 = vadd.f32 %v1135, %v1722
        %v1851 = vadd.f32 %v1246, %v1723
        %v1852 = vadd.f32 %v1248, %v1724
        %v1853 = vadd.f32 %v1359, %v1725
        %v1854 = vadd.f32 %v1361, %v1726
        %v1855 = vadd.f32 %v574, %v1727
        %v1856 = vadd.f32 %v576, %v1728
        %v1857 = vadd.f32 %v687, %v1729
        %v1858 = vadd.f32 %v689, %v1730
        %v1859 = vadd.f32 %v800, %v1731
        %v1860 = vadd.f32 %v802, %v1732
        %v1861 = vadd.f32 %v913, %v1733
        %v1862 = vadd.f32 %v915, %v1734
        %v1863 = vadd.f32 %v1026, %v1735
        %v1864 = vadd.f32 %v1028, %v1736
        %v1865 = vadd.f32 %v1139, %v1737
        %v1866 = vadd.f32 %v1141, %v1738
        %v1867 = vadd.f32 %v1252, %v1739
        %v1868 = vadd.f32 %v1254, %v1740
        %v1869 = vadd.f32 %v1365, %v1741
        %v1870 = vadd.f32 %v1367, %v1742
        %v1871 = vadd.f32 %v580, %v1743
        %v1872 = vadd.f32 %v582, %v1744
        %v1873 = vadd.f32 %v693, %v1745
        %v1874 = vadd.f32 %v695, %v1746
        %v1875 = vadd.f32 %v806, %v1747
        %v1876 = vadd.f32 %v808, %v1748
        %v1877 = vadd.f32 %v919, %v1749
        %v1878 = vadd.f32 %v921, %v1750
        %v1879 = vadd.f32 %v1032, %v1751
        %v1880 = vadd.f32 %v1034, %v1752
        %v1881 = vadd.f32 %v1145, %v1753
        %v1882 = vadd.f32 %v1147, %v1754
        %v1883 = vadd.f32 %v1258, %v1755
        %v1884 = vadd.f32 %v1260, %v1756
        %v1885 = vadd.f32 %v1371, %v1757
        %v1886 = vadd.f32 %v1373, %v1758
        %v1887 = vmul.f32 %v1759, 0.7978846
        %v1888 = vmul.f32 %v1760, 0.7978846
        %v1889 = vmul.f32 %v1761, 0.7978846
        %v1890 = vmul.f32 %v1762, 0.7978846
        %v1891 = vmul.f32 %v1763, 0.7978846
        %v1892 = vmul.f32 %v1764, 0.7978846
        %v1893 = vmul.f32 %v1765, 0.7978846
        %v1894 = vmul.f32 %v1766, 0.7978846
        %v1895 = vmul.f32 %v1767, 0.7978846
        %v1896 = vmul.f32 %v1768, 0.7978846
        %v1897 = vmul.f32 %v1769, 0.7978846
        %v1898 = vmul.f32 %v1770, 0.7978846
        %v1899 = vmul.f32 %v1771, 0.7978846
        %v1900 = vmul.f32 %v1772, 0.7978846
        %v1901 = vmul.f32 %v1773, 0.7978846
        %v1902 = vmul.f32 %v1774, 0.7978846
        %v1903 = vmul.f32 %v1775, 0.7978846
        %v1904 = vmul.f32 %v1776, 0.7978846
        %v1905 = vmul.f32 %v1777, 0.7978846
        %v1906 = vmul.f32 %v1778, 0.7978846
        %v1907 = vmul.f32 %v1779, 0.7978846
        %v1908 = vmul.f32 %v1780, 0.7978846
        %v1909 = vmul.f32 %v1781, 0.7978846
        %v1910 = vmul.f32 %v1782, 0.7978846
        %v1911 = vmul.f32 %v1783, 0.7978846
        %v1912 = vmul.f32 %v1784, 0.7978846
        %v1913 = vmul.f32 %v1785, 0.7978846
        %v1914 = vmul.f32 %v1786, 0.7978846
        %v1915 = vmul.f32 %v1787, 0.7978846
        %v1916 = vmul.f32 %v1788, 0.7978846
        %v1917 = vmul.f32 %v1789, 0.7978846
        %v1918 = vmul.f32 %v1790, 0.7978846
        %v1919 = vmul.f32 %v1791, 0.7978846
        %v1920 = vmul.f32 %v1792, 0.7978846
        %v1921 = vmul.f32 %v1793, 0.7978846
        %v1922 = vmul.f32 %v1794, 0.7978846
        %v1923 = vmul.f32 %v1795, 0.7978846
        %v1924 = vmul.f32 %v1796, 0.7978846
        %v1925 = vmul.f32 %v1797, 0.7978846
        %v1926 = vmul.f32 %v1798, 0.7978846
        %v1927 = vmul.f32 %v1799, 0.7978846
        %v1928 = vmul.f32 %v1800, 0.7978846
        %v1929 = vmul.f32 %v1801, 0.7978846
        %v1930 = vmul.f32 %v1802, 0.7978846
        %v1931 = vmul.f32 %v1803, 0.7978846
        %v1932 = vmul.f32 %v1804, 0.7978846
        %v1933 = vmul.f32 %v1805, 0.7978846
        %v1934 = vmul.f32 %v1806, 0.7978846
        %v1935 = vmul.f32 %v1807, 0.7978846
        %v1936 = vmul.f32 %v1808, 0.7978846
        %v1937 = vmul.f32 %v1809, 0.7978846
        %v1938 = vmul.f32 %v1810, 0.7978846
        %v1939 = vmul.f32 %v1811, 0.7978846
        %v1940 = vmul.f32 %v1812, 0.7978846
        %v1941 = vmul.f32 %v1813, 0.7978846
        %v1942 = vmul.f32 %v1814, 0.7978846
        %v1943 = vmul.f32 %v1815, 0.7978846
        %v1944 = vmul.f32 %v1816, 0.7978846
        %v1945 = vmul.f32 %v1817, 0.7978846
        %v1946 = vmul.f32 %v1818, 0.7978846
        %v1947 = vmul.f32 %v1819, 0.7978846
        %v1948 = vmul.f32 %v1820, 0.7978846
        %v1949 = vmul.f32 %v1821, 0.7978846
        %v1950 = vmul.f32 %v1822, 0.7978846
        %v1951 = vmul.f32 %v1823, 0.7978846
        %v1952 = vmul.f32 %v1824, 0.7978846
        %v1953 = vmul.f32 %v1825, 0.7978846
        %v1954 = vmul.f32 %v1826, 0.7978846
        %v1955 = vmul.f32 %v1827, 0.7978846
        %v1956 = vmul.f32 %v1828, 0.7978846
        %v1957 = vmul.f32 %v1829, 0.7978846
        %v1958 = vmul.f32 %v1830, 0.7978846
        %v1959 = vmul.f32 %v1831, 0.7978846
        %v1960 = vmul.f32 %v1832, 0.7978846
        %v1961 = vmul.f32 %v1833, 0.7978846
        %v1962 = vmul.f32 %v1834, 0.7978846
        %v1963 = vmul.f32 %v1835, 0.7978846
        %v1964 = vmul.f32 %v1836, 0.7978846
        %v1965 = vmul.f32 %v1837, 0.7978846
        %v1966 = vmul.f32 %v1838, 0.7978846
        %v1967 = vmul.f32 %v1839, 0.7978846
        %v1968 = vmul.f32 %v1840, 0.7978846
        %v1969 = vmul.f32 %v1841, 0.7978846
        %v1970 = vmul.f32 %v1842, 0.7978846
        %v1971 = vmul.f32 %v1843, 0.7978846
        %v1972 = vmul.f32 %v1844, 0.7978846
        %v1973 = vmul.f32 %v1845, 0.7978846
        %v1974 = vmul.f32 %v1846, 0.7978846
        %v1975 = vmul.f32 %v1847, 0.7978846
        %v1976 = vmul.f32 %v1848, 0.7978846
        %v1977 = vmul.f32 %v1849, 0.7978846
        %v1978 = vmul.f32 %v1850, 0.7978846
        %v1979 = vmul.f32 %v1851, 0.7978846
        %v1980 = vmul.f32 %v1852, 0.7978846
        %v1981 = vmul.f32 %v1853, 0.7978846
        %v1982 = vmul.f32 %v1854, 0.7978846
        %v1983 = vmul.f32 %v1855, 0.7978846
        %v1984 = vmul.f32 %v1856, 0.7978846
        %v1985 = vmul.f32 %v1857, 0.7978846
        %v1986 = vmul.f32 %v1858, 0.7978846
        %v1987 = vmul.f32 %v1859, 0.7978846
        %v1988 = vmul.f32 %v1860, 0.7978846
        %v1989 = vmul.f32 %v1861, 0.7978846
        %v1990 = vmul.f32 %v1862, 0.7978846
        %v1991 = vmul.f32 %v1863, 0.7978846
        %v1992 = vmul.f32 %v1864, 0.7978846
        %v1993 = vmul.f32 %v1865, 0.7978846
        %v1994 = vmul.f32 %v1866, 0.7978846
        %v1995 = vmul.f32 %v1867, 0.7978846
        %v1996 = vmul.f32 %v1868, 0.7978846
        %v1997 = vmul.f32 %v1869, 0.7978846
        %v1998 = vmul.f32 %v1870, 0.7978846
        %v1999 = vmul.f32 %v1871, 0.7978846
        %v2000 = vmul.f32 %v1872, 0.7978846
        %v2001 = vmul.f32 %v1873, 0.7978846
        %v2002 = vmul.f32 %v1874, 0.7978846
        %v2003 = vmul.f32 %v1875, 0.7978846
        %v2004 = vmul.f32 %v1876, 0.7978846
        %v2005 = vmul.f32 %v1877, 0.7978846
        %v2006 = vmul.f32 %v1878, 0.7978846
        %v2007 = vmul.f32 %v1879, 0.7978846
        %v2008 = vmul.f32 %v1880, 0.7978846
        %v2009 = vmul.f32 %v1881, 0.7978846
        %v2010 = vmul.f32 %v1882, 0.7978846
        %v2011 = vmul.f32 %v1883, 0.7978846
        %v2012 = vmul.f32 %v1884, 0.7978846
        %v2013 = vmul.f32 %v1885, 0.7978846
        %v2014 = vmul.f32 %v1886, 0.7978846
        %v2015 = vmul.f32 %v538, 0.5
        %v2016 = vmul.f32 %v540, 0.5
        %v2017 = vmul.f32 %v651, 0.5
        %v2018 = vmul.f32 %v653, 0.5
        %v2019 = vmul.f32 %v764, 0.5
        %v2020 = vmul.f32 %v766, 0.5
        %v2021 = vmul.f32 %v877, 0.5
        %v2022 = vmul.f32 %v879, 0.5
        %v2023 = vmul.f32 %v990, 0.5
        %v2024 = vmul.f32 %v992, 0.5
        %v2025 = vmul.f32 %v1103, 0.5
        %v2026 = vmul.f32 %v1105, 0.5
        %v2027 = vmul.f32 %v1216, 0.5
        %v2028 = vmul.f32 %v1218, 0.5
        %v2029 = vmul.f32 %v1329, 0.5
        %v2030 = vmul.f32 %v1331, 0.5
        %v2031 = vmul.f32 %v544, 0.5
        %v2032 = vmul.f32 %v546, 0.5
        %v2033 = vmul.f32 %v657, 0.5
        %v2034 = vmul.f32 %v659, 0.5
        %v2035 = vmul.f32 %v770, 0.5
        %v2036 = vmul.f32 %v772, 0.5
        %v2037 = vmul.f32 %v883, 0.5
        %v2038 = vmul.f32 %v885, 0.5
        %v2039 = vmul.f32 %v996, 0.5
        %v2040 = vmul.f32 %v998, 0.5
        %v2041 = vmul.f32 %v1109, 0.5
        %v2042 = vmul.f32 %v1111, 0.5
        %v2043 = vmul.f32 %v1222, 0.5
        %v2044 = vmul.f32 %v1224, 0.5
        %v2045 = vmul.f32 %v1335, 0.5
        %v2046 = vmul.f32 %v1337, 0.5
        %v2047 = vmul.f32 %v550, 0.5
        %v2048 = vmul.f32 %v552, 0.5
        %v2049 = vmul.f32 %v663, 0.5
        %v2050 = vmul.f32 %v665, 0.5
        %v2051 = vmul.f32 %v776, 0.5
        %v2052 = vmul.f32 %v778, 0.5
        %v2053 = vmul.f32 %v889, 0.5
        %v2054 = vmul.f32 %v891, 0.5
        %v2055 = vmul.f32 %v1002, 0.5
        %v2056 = vmul.f32 %v1004, 0.5
        %v2057 = vmul.f32 %v1115, 0.5
        %v2058 = vmul.f32 %v1117, 0.5
        %v2059 = vmul.f32 %v1228, 0.5
        %v2060 = vmul.f32 %v1230, 0.5
        %v2061 = vmul.f32 %v1341, 0.5
        %v2062 = vmul.f32 %v1343, 0.5
        %v2063 = vmul.f32 %v556, 0.5
        %v2064 = vmul.f32 %v558, 0.5
        %v2065 = vmul.f32 %v669, 0.5
        %v2066 = vmul.f32 %v671, 0.5
        %v2067 = vmul.f32 %v782, 0.5
        %v2068 = vmul.f32 %v784, 0.5
        %v2069 = vmul.f32 %v895, 0.5
        %v2070 = vmul.f32 %v897, 0.5
        %v2071 = vmul.f32 %v1008, 0.5
        %v2072 = vmul.f32 %v1010, 0.5
        %v2073 = vmul.f32 %v1121, 0.5
        %v2074 = vmul.f32 %v1123, 0.5
        %v2075 = vmul.f32 %v1234, 0.5
        %v2076 = vmul.f32 %v1236, 0.5
        %v2077 = vmul.f32 %v1347, 0.5
        %v2078 = vmul.f32 %v1349, 0.5
        %v2079 = vmul.f32 %v562, 0.5
        %v2080 = vmul.f32 %v564, 0.5
        %v2081 = vmul.f32 %v675, 0.5
        %v2082 = vmul.f32 %v677, 0.5
        %v2083 = vmul.f32 %v788, 0.5
        %v2084 = vmul.f32 %v790, 0.5
        %v2085 = vmul.f32 %v901, 0.5
        %v2086 = vmul.f32 %v903, 0.5
        %v2087 = vmul.f32 %v1014, 0.5
        %v2088 = vmul.f32 %v1016, 0.5
        %v2089 = vmul.f32 %v1127, 0.5
        %v2090 = vmul.f32 %v1129, 0.5
        %v2091 = vmul.f32 %v1240, 0.5
        %v2092 = vmul.f32 %v1242, 0.5
        %v2093 = vmul.f32 %v1353, 0.5
        %v2094 = vmul.f32 %v1355, 0.5
        %v2095 = vmul.f32 %v568, 0.5
        %v2096 = vmul.f32 %v570, 0.5
        %v2097 = vmul.f32 %v681, 0.5
        %v2098 = vmul.f32 %v683, 0.5
        %v2099 = vmul.f32 %v794, 0.5
        %v2100 = vmul.f32 %v796, 0.5
        %v2101 = vmul.f32 %v907, 0.5
        %v2102 = vmul.f32 %v909, 0.5
        %v2103 = vmul.f32 %v1020, 0.5
        %v2104 = vmul.f32 %v1022, 0.5
        %v2105 = vmul.f32 %v1133, 0.5
        %v2106 = vmul.f32 %v1135, 0.5
        %v2107 = vmul.f32 %v1246, 0.5
        %v2108 = vmul.f32 %v1248, 0.5
        %v2109 = vmul.f32 %v1359, 0.5
        %v2110 = vmul.f32 %v1361, 0.5
        %v2111 = vmul.f32 %v574, 0.5
        %v2112 = vmul.f32 %v576, 0.5
        %v2113 = vmul.f32 %v687, 0.5
        %v2114 = vmul.f32 %v689, 0.5
        %v2115 = vmul.f32 %v800, 0.5
        %v2116 = vmul.f32 %v802, 0.5
        %v2117 = vmul.f32 %v913, 0.5
        %v2118 = vmul.f32 %v915, 0.5
        %v2119 = vmul.f32 %v1026, 0.5
        %v2120 = vmul.f32 %v1028, 0.5
        %v2121 = vmul.f32 %v1139, 0.5
        %v2122 = vmul.f32 %v1141, 0.5
        %v2123 = vmul.f32 %v1252, 0.5
        %v2124 = vmul.f32 %v1254, 0.5
        %v2125 = vmul.f32 %v1365, 0.5
        %v2126 = vmul.f32 %v1367, 0.5
        %v2127 = vmul.f32 %v580, 0.5
        %v2128 = vmul.f32 %v582, 0.5
        %v2129 = vmul.f32 %v693, 0.5
        %v2130 = vmul.f32 %v695, 0.5
        %v2131 = vmul.f32 %v806, 0.5
        %v2132 = vmul.f32 %v808, 0.5
        %v2133 = vmul.f32 %v919, 0.5
        %v2134 = vmul.f32 %v921, 0.5
        %v2135 = vmul.f32 %v1032, 0.5
        %v2136 = vmul.f32 %v1034, 0.5
        %v2137 = vmul.f32 %v1145, 0.5
        %v2138 = vmul.f32 %v1147, 0.5
        %v2139 = vmul.f32 %v1258, 0.5
        %v2140 = vmul.f32 %v1260, 0.5
        %v2141 = vmul.f32 %v1371, 0.5
        %v2142 = vmul.f32 %v1373, 0.5
        %v2143 = vtanh.pop %v1887
        %v2144 = vtanh.pop %v1888
        %v2145 = vtanh.pop %v1889
        %v2146 = vtanh.pop %v1890
        %v2147 = vtanh.pop %v1891
        %v2148 = vtanh.pop %v1892
        %v2149 = vtanh.pop %v1893
        %v2150 = vtanh.pop %v1894
        %v2151 = vtanh.pop %v1895
        %v2152 = vtanh.pop %v1896
        %v2153 = vtanh.pop %v1897
        %v2154 = vtanh.pop %v1898
        %v2155 = vtanh.pop %v1899
        %v2156 = vtanh.pop %v1900
        %v2157 = vtanh.pop %v1901
        %v2158 = vtanh.pop %v1902
        %v2159 = vtanh.pop %v1903
        %v2160 = vtanh.pop %v1904
        %v2161 = vtanh.pop %v1905
        %v2162 = vtanh.pop %v1906
        %v2163 = vtanh.pop %v1907
        %v2164 = vtanh.pop %v1908
        %v2165 = vtanh.pop %v1909
        %v2166 = vtanh.pop %v1910
        %v2167 = vtanh.pop %v1911
        %v2168 = vtanh.pop %v1912
        %v2169 = vtanh.pop %v1913
        %v2170 = vtanh.pop %v1914
        %v2171 = vtanh.pop %v1915
        %v2172 = vtanh.pop %v1916
        %v2173 = vtanh.pop %v1917
        %v2174 = vtanh.pop %v1918
        %v2175 = vtanh.pop %v1919
        %v2176 = vtanh.pop %v1920
        %v2177 = vtanh.pop %v1921
        %v2178 = vtanh.pop %v1922
        %v2179 = vtanh.pop %v1923
        %v2180 = vtanh.pop %v1924
        %v2181 = vtanh.pop %v1925
        %v2182 = vtanh.pop %v1926
        %v2183 = vtanh.pop %v1927
        %v2184 = vtanh.pop %v1928
        %v2185 = vtanh.pop %v1929
        %v2186 = vtanh.pop %v1930
        %v2187 = vtanh.pop %v1931
        %v2188 = vtanh.pop %v1932
        %v2189 = vtanh.pop %v1933
        %v2190 = vtanh.pop %v1934
        %v2191 = vtanh.pop %v1935
        %v2192 = vtanh.pop %v1936
        %v2193 = vtanh.pop %v1937
        %v2194 = vtanh.pop %v1938
        %v2195 = vtanh.pop %v1939
        %v2196 = vtanh.pop %v1940
        %v2197 = vtanh.pop %v1941
        %v2198 = vtanh.pop %v1942
        %v2199 = vtanh.pop %v1943
        %v2200 = vtanh.pop %v1944
        %v2201 = vtanh.pop %v1945
        %v2202 = vtanh.pop %v1946
        %v2203 = vtanh.pop %v1947
        %v2204 = vtanh.pop %v1948
        %v2205 = vtanh.pop %v1949
        %v2206 = vtanh.pop %v1950
        %v2207 = vtanh.pop %v1951
        %v2208 = vtanh.pop %v1952
        %v2209 = vtanh.pop %v1953
        %v2210 = vtanh.pop %v1954
        %v2211 = vtanh.pop %v1955
        %v2212 = vtanh.pop %v1956
        %v2213 = vtanh.pop %v1957
        %v2214 = vtanh.pop %v1958
        %v2215 = vtanh.pop %v1959
        %v2216 = vtanh.pop %v1960
        %v2217 = vtanh.pop %v1961
        %v2218 = vtanh.pop %v1962
        %v2219 = vtanh.pop %v1963
        %v2220 = vtanh.pop %v1964
        %v2221 = vtanh.pop %v1965
        %v2222 = vtanh.pop %v1966
        %v2223 = vtanh.pop %v1967
        %v2224 = vtanh.pop %v1968
        %v2225 = vtanh.pop %v1969
        %v2226 = vtanh.pop %v1970
        %v2227 = vtanh.pop %v1971
        %v2228 = vtanh.pop %v1972
        %v2229 = vtanh.pop %v1973
        %v2230 = vtanh.pop %v1974
        %v2231 = vtanh.pop %v1975
        %v2232 = vtanh.pop %v1976
        %v2233 = vtanh.pop %v1977
        %v2234 = vtanh.pop %v1978
        %v2235 = vtanh.pop %v1979
        %v2236 = vtanh.pop %v1980
        %v2237 = vtanh.pop %v1981
        %v2238 = vtanh.pop %v1982
        %v2239 = vtanh.pop %v1983
        %v2240 = vtanh.pop %v1984
        %v2241 = vtanh.pop %v1985
        %v2242 = vtanh.pop %v1986
        %v2243 = vtanh.pop %v1987
        %v2244 = vtanh.pop %v1988
        %v2245 = vtanh.pop %v1989
        %v2246 = vtanh.pop %v1990
        %v2247 = vtanh.pop %v1991
        %v2248 = vtanh.pop %v1992
        %v2249 = vtanh.pop %v1993
        %v2250 = vtanh.pop %v1994
        %v2251 = vtanh.pop %v1995
        %v2252 = vtanh.pop %v1996
        %v2253 = vtanh.pop %v1997
        %v2254 = vtanh.pop %v1998
        %v2255 = vtanh.pop %v1999
        %v2256 = vtanh.pop %v2000
        %v2257 = vtanh.pop %v2001
        %v2258 = vtanh.pop %v2002
        %v2259 = vtanh.pop %v2003
        %v2260 = vtanh.pop %v2004
        %v2261 = vtanh.pop %v2005
        %v2262 = vtanh.pop %v2006
        %v2263 = vtanh.pop %v2007
        %v2264 = vtanh.pop %v2008
        %v2265 = vtanh.pop %v2009
        %v2266 = vtanh.pop %v2010
        %v2267 = vtanh.pop %v2011
        %v2268 = vtanh.pop %v2012
        %v2269 = vtanh.pop %v2013
        %v2270 = vtanh.pop %v2014
        %v2271 = vadd.f32 %v2143, 1.0
        %v2272 = vadd.f32 %v2144, 1.0
        %v2273 = vadd.f32 %v2145, 1.0
        %v2274 = vadd.f32 %v2146, 1.0
        %v2275 = vadd.f32 %v2147, 1.0
        %v2276 = vadd.f32 %v2148, 1.0
        %v2277 = vadd.f32 %v2149, 1.0
        %v2278 = vadd.f32 %v2150, 1.0
        %v2279 = vadd.f32 %v2151, 1.0
        %v2280 = vadd.f32 %v2152, 1.0
        %v2281 = vadd.f32 %v2153, 1.0
        %v2282 = vadd.f32 %v2154, 1.0
        %v2283 = vadd.f32 %v2155, 1.0
        %v2284 = vadd.f32 %v2156, 1.0
        %v2285 = vadd.f32 %v2157, 1.0
        %v2286 = vadd.f32 %v2158, 1.0
        %v2287 = vadd.f32 %v2159, 1.0
        %v2288 = vadd.f32 %v2160, 1.0
        %v2289 = vadd.f32 %v2161, 1.0
        %v2290 = vadd.f32 %v2162, 1.0
        %v2291 = vadd.f32 %v2163, 1.0
        %v2292 = vadd.f32 %v2164, 1.0
        %v2293 = vadd.f32 %v2165, 1.0
        %v2294 = vadd.f32 %v2166, 1.0
        %v2295 = vadd.f32 %v2167, 1.0
        %v2296 = vadd.f32 %v2168, 1.0
        %v2297 = vadd.f32 %v2169, 1.0
        %v2298 = vadd.f32 %v2170, 1.0
        %v2299 = vadd.f32 %v2171, 1.0
        %v2300 = vadd.f32 %v2172, 1.0
        %v2301 = vadd.f32 %v2173, 1.0
        %v2302 = vadd.f32 %v2174, 1.0
        %v2303 = vadd.f32 %v2175, 1.0
        %v2304 = vadd.f32 %v2176, 1.0
        %v2305 = vadd.f32 %v2177, 1.0
        %v2306 = vadd.f32 %v2178, 1.0
        %v2307 = vadd.f32 %v2179, 1.0
        %v2308 = vadd.f32 %v2180, 1.0
        %v2309 = vadd.f32 %v2181, 1.0
        %v2310 = vadd.f32 %v2182, 1.0
        %v2311 = vadd.f32 %v2183, 1.0
        %v2312 = vadd.f32 %v2184, 1.0
        %v2313 = vadd.f32 %v2185, 1.0
        %v2314 = vadd.f32 %v2186, 1.0
        %v2315 = vadd.f32 %v2187, 1.0
        %v2316 = vadd.f32 %v2188, 1.0
        %v2317 = vadd.f32 %v2189, 1.0
        %v2318 = vadd.f32 %v2190, 1.0
        %v2319 = vadd.f32 %v2191, 1.0
        %v2320 = vadd.f32 %v2192, 1.0
        %v2321 = vadd.f32 %v2193, 1.0
        %v2322 = vadd.f32 %v2194, 1.0
        %v2323 = vadd.f32 %v2195, 1.0
        %v2324 = vadd.f32 %v2196, 1.0
        %v2325 = vadd.f32 %v2197, 1.0
        %v2326 = vadd.f32 %v2198, 1.0
        %v2327 = vadd.f32 %v2199, 1.0
        %v2328 = vadd.f32 %v2200, 1.0
        %v2329 = vadd.f32 %v2201, 1.0
        %v2330 = vadd.f32 %v2202, 1.0
        %v2331 = vadd.f32 %v2203, 1.0
        %v2332 = vadd.f32 %v2204, 1.0
        %v2333 = vadd.f32 %v2205, 1.0
        %v2334 = vadd.f32 %v2206, 1.0
        %v2335 = vadd.f32 %v2207, 1.0
        %v2336 = vadd.f32 %v2208, 1.0
        %v2337 = vadd.f32 %v2209, 1.0
        %v2338 = vadd.f32 %v2210, 1.0
        %v2339 = vadd.f32 %v2211, 1.0
        %v2340 = vadd.f32 %v2212, 1.0
        %v2341 = vadd.f32 %v2213, 1.0
        %v2342 = vadd.f32 %v2214, 1.0
        %v2343 = vadd.f32 %v2215, 1.0
        %v2344 = vadd.f32 %v2216, 1.0
        %v2345 = vadd.f32 %v2217, 1.0
        %v2346 = vadd.f32 %v2218, 1.0
        %v2347 = vadd.f32 %v2219, 1.0
        %v2348 = vadd.f32 %v2220, 1.0
        %v2349 = vadd.f32 %v2221, 1.0
        %v2350 = vadd.f32 %v2222, 1.0
        %v2351 = vadd.f32 %v2223, 1.0
        %v2352 = vadd.f32 %v2224, 1.0
        %v2353 = vadd.f32 %v2225, 1.0
        %v2354 = vadd.f32 %v2226, 1.0
        %v2355 = vadd.f32 %v2227, 1.0
        %v2356 = vadd.f32 %v2228, 1.0
        %v2357 = vadd.f32 %v2229, 1.0
        %v2358 = vadd.f32 %v2230, 1.0
        %v2359 = vadd.f32 %v2231, 1.0
        %v2360 = vadd.f32 %v2232, 1.0
        %v2361 = vadd.f32 %v2233, 1.0
        %v2362 = vadd.f32 %v2234, 1.0
        %v2363 = vadd.f32 %v2235, 1.0
        %v2364 = vadd.f32 %v2236, 1.0
        %v2365 = vadd.f32 %v2237, 1.0
        %v2366 = vadd.f32 %v2238, 1.0
        %v2367 = vadd.f32 %v2239, 1.0
        %v2368 = vadd.f32 %v2240, 1.0
        %v2369 = vadd.f32 %v2241, 1.0
        %v2370 = vadd.f32 %v2242, 1.0
        %v2371 = vadd.f32 %v2243, 1.0
        %v2372 = vadd.f32 %v2244, 1.0
        %v2373 = vadd.f32 %v2245, 1.0
        %v2374 = vadd.f32 %v2246, 1.0
        %v2375 = vadd.f32 %v2247, 1.0
        %v2376 = vadd.f32 %v2248, 1.0
        %v2377 = vadd.f32 %v2249, 1.0
        %v2378 = vadd.f32 %v2250, 1.0
        %v2379 = vadd.f32 %v2251, 1.0
        %v2380 = vadd.f32 %v2252, 1.0
        %v2381 = vadd.f32 %v2253, 1.0
        %v2382 = vadd.f32 %v2254, 1.0
        %v2383 = vadd.f32 %v2255, 1.0
        %v2384 = vadd.f32 %v2256, 1.0
        %v2385 = vadd.f32 %v2257, 1.0
        %v2386 = vadd.f32 %v2258, 1.0
        %v2387 = vadd.f32 %v2259, 1.0
        %v2388 = vadd.f32 %v2260, 1.0
        %v2389 = vadd.f32 %v2261, 1.0
        %v2390 = vadd.f32 %v2262, 1.0
        %v2391 = vadd.f32 %v2263, 1.0
        %v2392 = vadd.f32 %v2264, 1.0
        %v2393 = vadd.f32 %v2265, 1.0
        %v2394 = vadd.f32 %v2266, 1.0
        %v2395 = vadd.f32 %v2267, 1.0
        %v2396 = vadd.f32 %v2268, 1.0
        %v2397 = vadd.f32 %v2269, 1.0
        %v2398 = vadd.f32 %v2270, 1.0
        %v2399 = vmul.f32 %v2015, %v2271
        %v2400 = vmul.f32 %v2016, %v2272
        %v2401 = vmul.f32 %v2017, %v2273
        %v2402 = vmul.f32 %v2018, %v2274
        %v2403 = vmul.f32 %v2019, %v2275
        %v2404 = vmul.f32 %v2020, %v2276
        %v2405 = vmul.f32 %v2021, %v2277
        %v2406 = vmul.f32 %v2022, %v2278
        %v2407 = vmul.f32 %v2023, %v2279
        %v2408 = vmul.f32 %v2024, %v2280
        %v2409 = vmul.f32 %v2025, %v2281
        %v2410 = vmul.f32 %v2026, %v2282
        %v2411 = vmul.f32 %v2027, %v2283
        %v2412 = vmul.f32 %v2028, %v2284
        %v2413 = vmul.f32 %v2029, %v2285
        %v2414 = vmul.f32 %v2030, %v2286
        %v2415 = vmul.f32 %v2031, %v2287
        %v2416 = vmul.f32 %v2032, %v2288
        %v2417 = vmul.f32 %v2033, %v2289
        %v2418 = vmul.f32 %v2034, %v2290
        %v2419 = vmul.f32 %v2035, %v2291
        %v2420 = vmul.f32 %v2036, %v2292
        %v2421 = vmul.f32 %v2037, %v2293
        %v2422 = vmul.f32 %v2038, %v2294
        %v2423 = vmul.f32 %v2039, %v2295
        %v2424 = vmul.f32 %v2040, %v2296
        %v2425 = vmul.f32 %v2041, %v2297
        %v2426 = vmul.f32 %v2042, %v2298
        %v2427 = vmul.f32 %v2043, %v2299
        %v2428 = vmul.f32 %v2044, %v2300
        %v2429 = vmul.f32 %v2045, %v2301
        %v2430 = vmul.f32 %v2046, %v2302
        %v2431 = vmul.f32 %v2047, %v2303
        %v2432 = vmul.f32 %v2048, %v2304
        %v2433 = vmul.f32 %v2049, %v2305
        %v2434 = vmul.f32 %v2050, %v2306
        %v2435 = vmul.f32 %v2051, %v2307
        %v2436 = vmul.f32 %v2052, %v2308
        %v2437 = vmul.f32 %v2053, %v2309
        %v2438 = vmul.f32 %v2054, %v2310
        %v2439 = vmul.f32 %v2055, %v2311
        %v2440 = vmul.f32 %v2056, %v2312
        %v2441 = vmul.f32 %v2057, %v2313
        %v2442 = vmul.f32 %v2058, %v2314
        %v2443 = vmul.f32 %v2059, %v2315
        %v2444 = vmul.f32 %v2060, %v2316
        %v2445 = vmul.f32 %v2061, %v2317
        %v2446 = vmul.f32 %v2062, %v2318
        %v2447 = vmul.f32 %v2063, %v2319
        %v2448 = vmul.f32 %v2064, %v2320
        %v2449 = vmul.f32 %v2065, %v2321
        %v2450 = vmul.f32 %v2066, %v2322
        %v2451 = vmul.f32 %v2067, %v2323
        %v2452 = vmul.f32 %v2068, %v2324
        %v2453 = vmul.f32 %v2069, %v2325
        %v2454 = vmul.f32 %v2070, %v2326
        %v2455 = vmul.f32 %v2071, %v2327
        %v2456 = vmul.f32 %v2072, %v2328
        %v2457 = vmul.f32 %v2073, %v2329
        %v2458 = vmul.f32 %v2074, %v2330
        %v2459 = vmul.f32 %v2075, %v2331
        %v2460 = vmul.f32 %v2076, %v2332
        %v2461 = vmul.f32 %v2077, %v2333
        %v2462 = vmul.f32 %v2078, %v2334
        %v2463 = vmul.f32 %v2079, %v2335
        %v2464 = vmul.f32 %v2080, %v2336
        %v2465 = vmul.f32 %v2081, %v2337
        %v2466 = vmul.f32 %v2082, %v2338
        %v2467 = vmul.f32 %v2083, %v2339
        %v2468 = vmul.f32 %v2084, %v2340
        %v2469 = vmul.f32 %v2085, %v2341
        %v2470 = vmul.f32 %v2086, %v2342
        %v2471 = vmul.f32 %v2087, %v2343
        %v2472 = vmul.f32 %v2088, %v2344
        %v2473 = vmul.f32 %v2089, %v2345
        %v2474 = vmul.f32 %v2090, %v2346
        %v2475 = vmul.f32 %v2091, %v2347
        %v2476 = vmul.f32 %v2092, %v2348
        %v2477 = vmul.f32 %v2093, %v2349
        %v2478 = vmul.f32 %v2094, %v2350
        %v2479 = vmul.f32 %v2095, %v2351
        %v2480 = vmul.f32 %v2096, %v2352
        %v2481 = vmul.f32 %v2097, %v2353
        %v2482 = vmul.f32 %v2098, %v2354
        %v2483 = vmul.f32 %v2099, %v2355
        %v2484 = vmul.f32 %v2100, %v2356
        %v2485 = vmul.f32 %v2101, %v2357
        %v2486 = vmul.f32 %v2102, %v2358
        %v2487 = vmul.f32 %v2103, %v2359
        %v2488 = vmul.f32 %v2104, %v2360
        %v2489 = vmul.f32 %v2105, %v2361
        %v2490 = vmul.f32 %v2106, %v2362
        %v2491 = vmul.f32 %v2107, %v2363
        %v2492 = vmul.f32 %v2108, %v2364
        %v2493 = vmul.f32 %v2109, %v2365
        %v2494 = vmul.f32 %v2110, %v2366
        %v2495 = vmul.f32 %v2111, %v2367
        %v2496 = vmul.f32 %v2112, %v2368
        %v2497 = vmul.f32 %v2113, %v2369
        %v2498 = vmul.f32 %v2114, %v2370
        %v2499 = vmul.f32 %v2115, %v2371
        %v2500 = vmul.f32 %v2116, %v2372
        %v2501 = vmul.f32 %v2117, %v2373
        %v2502 = vmul.f32 %v2118, %v2374
        %v2503 = vmul.f32 %v2119, %v2375
        %v2504 = vmul.f32 %v2120, %v2376
        %v2505 = vmul.f32 %v2121, %v2377
        %v2506 = vmul.f32 %v2122, %v2378
        %v2507 = vmul.f32 %v2123, %v2379
        %v2508 = vmul.f32 %v2124, %v2380
        %v2509 = vmul.f32 %v2125, %v2381
        %v2510 = vmul.f32 %v2126, %v2382
        %v2511 = vmul.f32 %v2127, %v2383
        %v2512 = vmul.f32 %v2128, %v2384
        %v2513 = vmul.f32 %v2129, %v2385
        %v2514 = vmul.f32 %v2130, %v2386
        %v2515 = vmul.f32 %v2131, %v2387
        %v2516 = vmul.f32 %v2132, %v2388
        %v2517 = vmul.f32 %v2133, %v2389
        %v2518 = vmul.f32 %v2134, %v2390
        %v2519 = vmul.f32 %v2135, %v2391
        %v2520 = vmul.f32 %v2136, %v2392
        %v2521 = vmul.f32 %v2137, %v2393
        %v2522 = vmul.f32 %v2138, %v2394
        %v2523 = vmul.f32 %v2139, %v2395
        %v2524 = vmul.f32 %v2140, %v2396
        %v2525 = vmul.f32 %v2141, %v2397
        %v2526 = vmul.f32 %v2142, %v2398
        %2527 = vst [vmem:[%s160] sm:$0xff] %v2399
        %2528 = vst [vmem:[%s160 + $0x8] sm:$0xff] %v2400
        %2529 = vst [vmem:[%s160 + $0x10] sm:$0xff] %v2401
        %2530 = vst [vmem:[%s160 + $0x18] sm:$0xff] %v2402
        %2531 = vst [vmem:[%s160 + $0x20] sm:$0xff] %v2403
        %2532 = vst [vmem:[%s160 + $0x28] sm:$0xff] %v2404
        %2533 = vst [vmem:[%s160 + $0x30] sm:$0xff] %v2405
        %2534 = vst [vmem:[%s160 + $0x38] sm:$0xff] %v2406
        %2535 = vst [vmem:[%s160 + $0x40] sm:$0xff] %v2407
        %2536 = vst [vmem:[%s160 + $0x48] sm:$0xff] %v2408
        %2537 = vst [vmem:[%s160 + $0x50] sm:$0xff] %v2409
        %2538 = vst [vmem:[%s160 + $0x58] sm:$0xff] %v2410
        %2539 = vst [vmem:[%s160 + $0x60] sm:$0xff] %v2411
        %2540 = vst [vmem:[%s160 + $0x68] sm:$0xff] %v2412
        %2541 = vst [vmem:[%s160 + $0x70] sm:$0xff] %v2413
        %2542 = vst [vmem:[%s160 + $0x78] sm:$0xff] %v2414
        %2543 = vst [vmem:[%s160 + $0x80] sm:$0xff] %v2415
        %2544 = vst [vmem:[%s160 + $0x88] sm:$0xff] %v2416
        %2545 = vst [vmem:[%s160 + $0x90] sm:$0xff] %v2417
        %2546 = vst [vmem:[%s160 + $0x98] sm:$0xff] %v2418
        %2547 = vst [vmem:[%s160 + $0xa0] sm:$0xff] %v2419
        %2548 = vst [vmem:[%s160 + $0xa8] sm:$0xff] %v2420
        %2549 = vst [vmem:[%s160 + $0xb0] sm:$0xff] %v2421
        %2550 = vst [vmem:[%s160 + $0xb8] sm:$0xff] %v2422
        %2551 = vst [vmem:[%s160 + $0xc0] sm:$0xff] %v2423
        %2552 = vst [vmem:[%s160 + $0xc8] sm:$0xff] %v2424
        %2553 = vst [vmem:[%s160 + $0xd0] sm:$0xff] %v2425
        %2554 = vst [vmem:[%s160 + $0xd8] sm:$0xff] %v2426
        %2555 = vst [vmem:[%s160 + $0xe0] sm:$0xff] %v2427
        %2556 = vst [vmem:[%s160 + $0xe8] sm:$0xff] %v2428
        %2557 = vst [vmem:[%s160 + $0xf0] sm:$0xff] %v2429
        %2558 = vst [vmem:[%s160 + $0xf8] sm:$0xff] %v2430
        %2559 = vst [vmem:[%s160 + $0x100] sm:$0xff] %v2431
        %2560 = vst [vmem:[%s160 + $0x108] sm:$0xff] %v2432
        %2561 = vst [vmem:[%s160 + $0x110] sm:$0xff] %v2433
        %2562 = vst [vmem:[%s160 + $0x118] sm:$0xff] %v2434
        %2563 = vst [vmem:[%s160 + $0x120] sm:$0xff] %v2435
        %2564 = vst [vmem:[%s160 + $0x128] sm:$0xff] %v2436
        %2565 = vst [vmem:[%s160 + $0x130] sm:$0xff] %v2437
        %2566 = vst [vmem:[%s160 + $0x138] sm:$0xff] %v2438
        %2567 = vst [vmem:[%s160 + $0x140] sm:$0xff] %v2439
        %2568 = vst [vmem:[%s160 + $0x148] sm:$0xff] %v2440
        %2569 = vst [vmem:[%s160 + $0x150] sm:$0xff] %v2441
        %2570 = vst [vmem:[%s160 + $0x158] sm:$0xff] %v2442
        %2571 = vst [vmem:[%s160 + $0x160] sm:$0xff] %v2443
        %2572 = vst [vmem:[%s160 + $0x168] sm:$0xff] %v2444
        %2573 = vst [vmem:[%s160 + $0x170] sm:$0xff] %v2445
        %2574 = vst [vmem:[%s160 + $0x178] sm:$0xff] %v2446
        %2575 = vst [vmem:[%s160 + $0x180] sm:$0xff] %v2447
        %2576 = vst [vmem:[%s160 + $0x188] sm:$0xff] %v2448
        %2577 = vst [vmem:[%s160 + $0x190] sm:$0xff] %v2449
        %2578 = vst [vmem:[%s160 + $0x198] sm:$0xff] %v2450
        %2579 = vst [vmem:[%s160 + $0x1a0] sm:$0xff] %v2451
        %2580 = vst [vmem:[%s160 + $0x1a8] sm:$0xff] %v2452
        %2581 = vst [vmem:[%s160 + $0x1b0] sm:$0xff] %v2453
        %2582 = vst [vmem:[%s160 + $0x1b8] sm:$0xff] %v2454
        %2583 = vst [vmem:[%s160 + $0x1c0] sm:$0xff] %v2455
        %2584 = vst [vmem:[%s160 + $0x1c8] sm:$0xff] %v2456
        %2585 = vst [vmem:[%s160 + $0x1d0] sm:$0xff] %v2457
        %2586 = vst [vmem:[%s160 + $0x1d8] sm:$0xff] %v2458
        %2587 = vst [vmem:[%s160 + $0x1e0] sm:$0xff] %v2459
        %2588 = vst [vmem:[%s160 + $0x1e8] sm:$0xff] %v2460
        %2589 = vst [vmem:[%s160 + $0x1f0] sm:$0xff] %v2461
        %2590 = vst [vmem:[%s160 + $0x1f8] sm:$0xff] %v2462
        %2591 = vst [vmem:[%s160 + $0x200] sm:$0xff] %v2463
        %2592 = vst [vmem:[%s160 + $0x208] sm:$0xff] %v2464
        %2593 = vst [vmem:[%s160 + $0x210] sm:$0xff] %v2465
        %2594 = vst [vmem:[%s160 + $0x218] sm:$0xff] %v2466
        %2595 = vst [vmem:[%s160 + $0x220] sm:$0xff] %v2467
        %2596 = vst [vmem:[%s160 + $0x228] sm:$0xff] %v2468
        %2597 = vst [vmem:[%s160 + $0x230] sm:$0xff] %v2469
        %2598 = vst [vmem:[%s160 + $0x238] sm:$0xff] %v2470
        %2599 = vst [vmem:[%s160 + $0x240] sm:$0xff] %v2471
        %2600 = vst [vmem:[%s160 + $0x248] sm:$0xff] %v2472
        %2601 = vst [vmem:[%s160 + $0x250] sm:$0xff] %v2473
        %2602 = vst [vmem:[%s160 + $0x258] sm:$0xff] %v2474
        %2603 = vst [vmem:[%s160 + $0x260] sm:$0xff] %v2475
        %2604 = vst [vmem:[%s160 + $0x268] sm:$0xff] %v2476
        %2605 = vst [vmem:[%s160 + $0x270] sm:$0xff] %v2477
        %2606 = vst [vmem:[%s160 + $0x278] sm:$0xff] %v2478
        %2607 = vst [vmem:[%s160 + $0x280] sm:$0xff] %v2479
        %2608 = vst [vmem:[%s160 + $0x288] sm:$0xff] %v2480
        %2609 = vst [vmem:[%s160 + $0x290] sm:$0xff] %v2481
        %2610 = vst [vmem:[%s160 + $0x298] sm:$0xff] %v2482
        %2611 = vst [vmem:[%s160 + $0x2a0] sm:$0xff] %v2483
        %2612 = vst [vmem:[%s160 + $0x2a8] sm:$0xff] %v2484
        %2613 = vst [vmem:[%s160 + $0x2b0] sm:$0xff] %v2485
        %2614 = vst [vmem:[%s160 + $0x2b8] sm:$0xff] %v2486
        %2615 = vst [vmem:[%s160 + $0x2c0] sm:$0xff] %v2487
        %2616 = vst [vmem:[%s160 + $0x2c8] sm:$0xff] %v2488
        %2617 = vst [vmem:[%s160 + $0x2d0] sm:$0xff] %v2489
        %2618 = vst [vmem:[%s160 + $0x2d8] sm:$0xff] %v2490
        %2619 = vst [vmem:[%s160 + $0x2e0] sm:$0xff] %v2491
        %2620 = vst [vmem:[%s160 + $0x2e8] sm:$0xff] %v2492
        %2621 = vst [vmem:[%s160 + $0x2f0] sm:$0xff] %v2493
        %2622 = vst [vmem:[%s160 + $0x2f8] sm:$0xff] %v2494
        %2623 = vst [vmem:[%s160 + $0x300] sm:$0xff] %v2495
        %2624 = vst [vmem:[%s160 + $0x308] sm:$0xff] %v2496
        %2625 = vst [vmem:[%s160 + $0x310] sm:$0xff] %v2497
        %2626 = vst [vmem:[%s160 + $0x318] sm:$0xff] %v2498
        %2627 = vst [vmem:[%s160 + $0x320] sm:$0xff] %v2499
        %2628 = vst [vmem:[%s160 + $0x328] sm:$0xff] %v2500
        %2629 = vst [vmem:[%s160 + $0x330] sm:$0xff] %v2501
        %2630 = vst [vmem:[%s160 + $0x338] sm:$0xff] %v2502
        %2631 = vst [vmem:[%s160 + $0x340] sm:$0xff] %v2503
        %2632 = vst [vmem:[%s160 + $0x348] sm:$0xff] %v2504
        %2633 = vst [vmem:[%s160 + $0x350] sm:$0xff] %v2505
        %2634 = vst [vmem:[%s160 + $0x358] sm:$0xff] %v2506
        %2635 = vst [vmem:[%s160 + $0x360] sm:$0xff] %v2507
        %2636 = vst [vmem:[%s160 + $0x368] sm:$0xff] %v2508
        %2637 = vst [vmem:[%s160 + $0x370] sm:$0xff] %v2509
        %2638 = vst [vmem:[%s160 + $0x378] sm:$0xff] %v2510
        %2639 = vst [vmem:[%s160 + $0x380] sm:$0xff] %v2511
        %2640 = vst [vmem:[%s160 + $0x388] sm:$0xff] %v2512
        %2641 = vst [vmem:[%s160 + $0x390] sm:$0xff] %v2513
        %2642 = vst [vmem:[%s160 + $0x398] sm:$0xff] %v2514
        %2643 = vst [vmem:[%s160 + $0x3a0] sm:$0xff] %v2515
        %2644 = vst [vmem:[%s160 + $0x3a8] sm:$0xff] %v2516
        %2645 = vst [vmem:[%s160 + $0x3b0] sm:$0xff] %v2517
        %2646 = vst [vmem:[%s160 + $0x3b8] sm:$0xff] %v2518
        %2647 = vst [vmem:[%s160 + $0x3c0] sm:$0xff] %v2519
        %2648 = vst [vmem:[%s160 + $0x3c8] sm:$0xff] %v2520
        %2649 = vst [vmem:[%s160 + $0x3d0] sm:$0xff] %v2521
        %2650 = vst [vmem:[%s160 + $0x3d8] sm:$0xff] %v2522
        %2651 = vst [vmem:[%s160 + $0x3e0] sm:$0xff] %v2523
        %2652 = vst [vmem:[%s160 + $0x3e8] sm:$0xff] %v2524
        %2653 = vst [vmem:[%s160 + $0x3f0] sm:$0xff] %v2525
        %2654 = vst [vmem:[%s160 + $0x3f8] sm:$0xff] %v2526
        %s2655 = sand.u32 %s90, 1
        %s2656 = sand.u32 %s90, 1
        %s2657 = smul.addr %s2656, 1024
        %s2658 = scalar_lea.vmem [#allocation2], %s2657
        // Predicated region
        $region33: #{model_forward.2} parent=31 // pred_check
          %p2659 = pneg %p100
        $region34: #{model_forward.2} parent=31 // pred_check_branch
          %2661 = sbr.rel (%p2659) target = $region36
        $region35: #{model_forward.2} parent=31 // pred_region
          %s2662 = smul.u32 16, %s14
          %s2663 = smul.addr %s2662, 8
          %s2664 = scalar_lea.vmem %s3, %s2663
          // Predicated region
          $region37: #{model_forward.2} parent=35 // pred_check
            _
          $region38: #{model_forward.2} parent=35 // pred_check_branch
            %2666 = sbr.rel (0) target = $region40
          $region39: #{model_forward.2} parent=35 // pred_region
            // Predicated region
            $region41: #{model_forward.2} parent=39 // pred_check
              _
            $region42: #{model_forward.2} parent=39 // pred_check_branch
              %2668 = sbr.rel (0) target = $region44
            $region43: #{model_forward.2} parent=39 // pred_region
              loop: start=0, step=1, limit=1
              $region45: #{model_forward.2} parent=43 // loop_pre_header
                _
              $region46: #{model_forward.2} parent=43 // loop_header
                %s2670 = sphi 0, %s2674
                %p2671 = scmp.ge.s32.totalorder %s2670, 1
                %s2675 = sphi %s2658, %s2658
                %s2676 = sphi %s2664, %s2664
              $region47: #{model_forward.2} parent=43 // loop_header_branch
                %2673 = sbr.rel (%p2671) target = $region51
              $region48: #{model_forward.2} parent=43 // loop_body
                %v2677 = vld [vmem:[%s2675] sm:$0xff]
                %2678 = vst [vmem:[%s2676] sm:$0xff] %v2677
                %v2679 = vld [vmem:[%s2675 + $0x8] sm:$0xff]
                %2680 = vst [vmem:[%s2676 + $0x8] sm:$0xff] %v2679
                %v2681 = vld [vmem:[%s2675 + $0x10] sm:$0xff]
                %2682 = vst [vmem:[%s2676 + $0x10] sm:$0xff] %v2681
                %v2683 = vld [vmem:[%s2675 + $0x18] sm:$0xff]
                %2684 = vst [vmem:[%s2676 + $0x18] sm:$0xff] %v2683
                %v2685 = vld [vmem:[%s2675 + $0x20] sm:$0xff]
                %2686 = vst [vmem:[%s2676 + $0x20] sm:$0xff] %v2685
                %v2687 = vld [vmem:[%s2675 + $0x28] sm:$0xff]
                %2688 = vst [vmem:[%s2676 + $0x28] sm:$0xff] %v2687
                %v2689 = vld [vmem:[%s2675 + $0x30] sm:$0xff]
                %2690 = vst [vmem:[%s2676 + $0x30] sm:$0xff] %v2689
                %v2691 = vld [vmem:[%s2675 + $0x38] sm:$0xff]
                %2692 = vst [vmem:[%s2676 + $0x38] sm:$0xff] %v2691
                %v2693 = vld [vmem:[%s2675 + $0x40] sm:$0xff]
                %2694 = vst [vmem:[%s2676 + $0x40] sm:$0xff] %v2693
                %v2695 = vld [vmem:[%s2675 + $0x48] sm:$0xff]
                %2696 = vst [vmem:[%s2676 + $0x48] sm:$0xff] %v2695
                %v2697 = vld [vmem:[%s2675 + $0x50] sm:$0xff]
                %2698 = vst [vmem:[%s2676 + $0x50] sm:$0xff] %v2697
                %v2699 = vld [vmem:[%s2675 + $0x58] sm:$0xff]
                %2700 = vst [vmem:[%s2676 + $0x58] sm:$0xff] %v2699
                %v2701 = vld [vmem:[%s2675 + $0x60] sm:$0xff]
                %2702 = vst [vmem:[%s2676 + $0x60] sm:$0xff] %v2701
                %v2703 = vld [vmem:[%s2675 + $0x68] sm:$0xff]
                %2704 = vst [vmem:[%s2676 + $0x68] sm:$0xff] %v2703
                %v2705 = vld [vmem:[%s2675 + $0x70] sm:$0xff]
                %2706 = vst [vmem:[%s2676 + $0x70] sm:$0xff] %v2705
                %v2707 = vld [vmem:[%s2675 + $0x78] sm:$0xff]
                %2708 = vst [vmem:[%s2676 + $0x78] sm:$0xff] %v2707
                %v2709 = vld [vmem:[%s2675 + $0x80] sm:$0xff]
                %2710 = vst [vmem:[%s2676 + $0x100] sm:$0xff] %v2709
                %v2711 = vld [vmem:[%s2675 + $0x88] sm:$0xff]
                %2712 = vst [vmem:[%s2676 + $0x108] sm:$0xff] %v2711
                %v2713 = vld [vmem:[%s2675 + $0x90] sm:$0xff]
                %2714 = vst [vmem:[%s2676 + $0x110] sm:$0xff] %v2713
                %v2715 = vld [vmem:[%s2675 + $0x98] sm:$0xff]
                %2716 = vst [vmem:[%s2676 + $0x118] sm:$0xff] %v2715
                %v2717 = vld [vmem:[%s2675 + $0xa0] sm:$0xff]
                %2718 = vst [vmem:[%s2676 + $0x120] sm:$0xff] %v2717
                %v2719 = vld [vmem:[%s2675 + $0xa8] sm:$0xff]
                %2720 = vst [vmem:[%s2676 + $0x128] sm:$0xff] %v2719
                %v2721 = vld [vmem:[%s2675 + $0xb0] sm:$0xff]
                %2722 = vst [vmem:[%s2676 + $0x130] sm:$0xff] %v2721
                %v2723 = vld [vmem:[%s2675 + $0xb8] sm:$0xff]
                %2724 = vst [vmem:[%s2676 + $0x138] sm:$0xff] %v2723
                %v2725 = vld [vmem:[%s2675 + $0xc0] sm:$0xff]
                %2726 = vst [vmem:[%s2676 + $0x140] sm:$0xff] %v2725
                %v2727 = vld [vmem:[%s2675 + $0xc8] sm:$0xff]
                %2728 = vst [vmem:[%s2676 + $0x148] sm:$0xff] %v2727
                %v2729 = vld [vmem:[%s2675 + $0xd0] sm:$0xff]
                %2730 = vst [vmem:[%s2676 + $0x150] sm:$0xff] %v2729
                %v2731 = vld [vmem:[%s2675 + $0xd8] sm:$0xff]
                %2732 = vst [vmem:[%s2676 + $0x158] sm:$0xff] %v2731
                %v2733 = vld [vmem:[%s2675 + $0xe0] sm:$0xff]
                %2734 = vst [vmem:[%s2676 + $0x160] sm:$0xff] %v2733
                %v2735 = vld [vmem:[%s2675 + $0xe8] sm:$0xff]
                %2736 = vst [vmem:[%s2676 + $0x168] sm:$0xff] %v2735
                %v2737 = vld [vmem:[%s2675 + $0xf0] sm:$0xff]
                %2738 = vst [vmem:[%s2676 + $0x170] sm:$0xff] %v2737
                %v2739 = vld [vmem:[%s2675 + $0xf8] sm:$0xff]
                %2740 = vst [vmem:[%s2676 + $0x178] sm:$0xff] %v2739
                %v2741 = vld [vmem:[%s2675 + $0x100] sm:$0xff]
                %2742 = vst [vmem:[%s2676 + $0x200] sm:$0xff] %v2741
                %v2743 = vld [vmem:[%s2675 + $0x108] sm:$0xff]
                %2744 = vst [vmem:[%s2676 + $0x208] sm:$0xff] %v2743
                %v2745 = vld [vmem:[%s2675 + $0x110] sm:$0xff]
                %2746 = vst [vmem:[%s2676 + $0x210] sm:$0xff] %v2745
                %v2747 = vld [vmem:[%s2675 + $0x118] sm:$0xff]
                %2748 = vst [vmem:[%s2676 + $0x218] sm:$0xff] %v2747
                %v2749 = vld [vmem:[%s2675 + $0x120] sm:$0xff]
                %2750 = vst [vmem:[%s2676 + $0x220] sm:$0xff] %v2749
                %v2751 = vld [vmem:[%s2675 + $0x128] sm:$0xff]
                %2752 = vst [vmem:[%s2676 + $0x228] sm:$0xff] %v2751
                %v2753 = vld [vmem:[%s2675 + $0x130] sm:$0xff]
                %2754 = vst [vmem:[%s2676 + $0x230] sm:$0xff] %v2753
                %v2755 = vld [vmem:[%s2675 + $0x138] sm:$0xff]
                %2756 = vst [vmem:[%s2676 + $0x238] sm:$0xff] %v2755
                %v2757 = vld [vmem:[%s2675 + $0x140] sm:$0xff]
                %2758 = vst [vmem:[%s2676 + $0x240] sm:$0xff] %v2757
                %v2759 = vld [vmem:[%s2675 + $0x148] sm:$0xff]
                %2760 = vst [vmem:[%s2676 + $0x248] sm:$0xff] %v2759
                %v2761 = vld [vmem:[%s2675 + $0x150] sm:$0xff]
                %2762 = vst [vmem:[%s2676 + $0x250] sm:$0xff] %v2761
                %v2763 = vld [vmem:[%s2675 + $0x158] sm:$0xff]
                %2764 = vst [vmem:[%s2676 + $0x258] sm:$0xff] %v2763
                %v2765 = vld [vmem:[%s2675 + $0x160] sm:$0xff]
                %2766 = vst [vmem:[%s2676 + $0x260] sm:$0xff] %v2765
                %v2767 = vld [vmem:[%s2675 + $0x168] sm:$0xff]
                %2768 = vst [vmem:[%s2676 + $0x268] sm:$0xff] %v2767
                %v2769 = vld [vmem:[%s2675 + $0x170] sm:$0xff]
                %2770 = vst [vmem:[%s2676 + $0x270] sm:$0xff] %v2769
                %v2771 = vld [vmem:[%s2675 + $0x178] sm:$0xff]
                %2772 = vst [vmem:[%s2676 + $0x278] sm:$0xff] %v2771
                %v2773 = vld [vmem:[%s2675 + $0x180] sm:$0xff]
                %2774 = vst [vmem:[%s2676 + $0x300] sm:$0xff] %v2773
                %v2775 = vld [vmem:[%s2675 + $0x188] sm:$0xff]
                %2776 = vst [vmem:[%s2676 + $0x308] sm:$0xff] %v2775
                %v2777 = vld [vmem:[%s2675 + $0x190] sm:$0xff]
                %2778 = vst [vmem:[%s2676 + $0x310] sm:$0xff] %v2777
                %v2779 = vld [vmem:[%s2675 + $0x198] sm:$0xff]
                %2780 = vst [vmem:[%s2676 + $0x318] sm:$0xff] %v2779
                %v2781 = vld [vmem:[%s2675 + $0x1a0] sm:$0xff]
                %2782 = vst [vmem:[%s2676 + $0x320] sm:$0xff] %v2781
                %v2783 = vld [vmem:[%s2675 + $0x1a8] sm:$0xff]
                %2784 = vst [vmem:[%s2676 + $0x328] sm:$0xff] %v2783
                %v2785 = vld [vmem:[%s2675 + $0x1b0] sm:$0xff]
                %2786 = vst [vmem:[%s2676 + $0x330] sm:$0xff] %v2785
                %v2787 = vld [vmem:[%s2675 + $0x1b8] sm:$0xff]
                %2788 = vst [vmem:[%s2676 + $0x338] sm:$0xff] %v2787
                %v2789 = vld [vmem:[%s2675 + $0x1c0] sm:$0xff]
                %2790 = vst [vmem:[%s2676 + $0x340] sm:$0xff] %v2789
                %v2791 = vld [vmem:[%s2675 + $0x1c8] sm:$0xff]
                %2792 = vst [vmem:[%s2676 + $0x348] sm:$0xff] %v2791
                %v2793 = vld [vmem:[%s2675 + $0x1d0] sm:$0xff]
                %2794 = vst [vmem:[%s2676 + $0x350] sm:$0xff] %v2793
                %v2795 = vld [vmem:[%s2675 + $0x1d8] sm:$0xff]
                %2796 = vst [vmem:[%s2676 + $0x358] sm:$0xff] %v2795
                %v2797 = vld [vmem:[%s2675 + $0x1e0] sm:$0xff]
                %2798 = vst [vmem:[%s2676 + $0x360] sm:$0xff] %v2797
                %v2799 = vld [vmem:[%s2675 + $0x1e8] sm:$0xff]
                %2800 = vst [vmem:[%s2676 + $0x368] sm:$0xff] %v2799
                %v2801 = vld [vmem:[%s2675 + $0x1f0] sm:$0xff]
                %2802 = vst [vmem:[%s2676 + $0x370] sm:$0xff] %v2801
                %v2803 = vld [vmem:[%s2675 + $0x1f8] sm:$0xff]
                %2804 = vst [vmem:[%s2676 + $0x378] sm:$0xff] %v2803
                %v2805 = vld [vmem:[%s2675 + $0x200] sm:$0xff]
                %2806 = vst [vmem:[%s2676 + $0x400] sm:$0xff] %v2805
                %v2807 = vld [vmem:[%s2675 + $0x208] sm:$0xff]
                %2808 = vst [vmem:[%s2676 + $0x408] sm:$0xff] %v2807
                %v2809 = vld [vmem:[%s2675 + $0x210] sm:$0xff]
                %2810 = vst [vmem:[%s2676 + $0x410] sm:$0xff] %v2809
                %v2811 = vld [vmem:[%s2675 + $0x218] sm:$0xff]
                %2812 = vst [vmem:[%s2676 + $0x418] sm:$0xff] %v2811
                %v2813 = vld [vmem:[%s2675 + $0x220] sm:$0xff]
                %2814 = vst [vmem:[%s2676 + $0x420] sm:$0xff] %v2813
                %v2815 = vld [vmem:[%s2675 + $0x228] sm:$0xff]
                %2816 = vst [vmem:[%s2676 + $0x428] sm:$0xff] %v2815
                %v2817 = vld [vmem:[%s2675 + $0x230] sm:$0xff]
                %2818 = vst [vmem:[%s2676 + $0x430] sm:$0xff] %v2817
                %v2819 = vld [vmem:[%s2675 + $0x238] sm:$0xff]
                %2820 = vst [vmem:[%s2676 + $0x438] sm:$0xff] %v2819
                %v2821 = vld [vmem:[%s2675 + $0x240] sm:$0xff]
                %2822 = vst [vmem:[%s2676 + $0x440] sm:$0xff] %v2821
                %v2823 = vld [vmem:[%s2675 + $0x248] sm:$0xff]
                %2824 = vst [vmem:[%s2676 + $0x448] sm:$0xff] %v2823
                %v2825 = vld [vmem:[%s2675 + $0x250] sm:$0xff]
                %2826 = vst [vmem:[%s2676 + $0x450] sm:$0xff] %v2825
                %v2827 = vld [vmem:[%s2675 + $0x258] sm:$0xff]
                %2828 = vst [vmem:[%s2676 + $0x458] sm:$0xff] %v2827
                %v2829 = vld [vmem:[%s2675 + $0x260] sm:$0xff]
                %2830 = vst [vmem:[%s2676 + $0x460] sm:$0xff] %v2829
                %v2831 = vld [vmem:[%s2675 + $0x268] sm:$0xff]
                %2832 = vst [vmem:[%s2676 + $0x468] sm:$0xff] %v2831
                %v2833 = vld [vmem:[%s2675 + $0x270] sm:$0xff]
                %2834 = vst [vmem:[%s2676 + $0x470] sm:$0xff] %v2833
                %v2835 = vld [vmem:[%s2675 + $0x278] sm:$0xff]
                %2836 = vst [vmem:[%s2676 + $0x478] sm:$0xff] %v2835
                %v2837 = vld [vmem:[%s2675 + $0x280] sm:$0xff]
                %2838 = vst [vmem:[%s2676 + $0x500] sm:$0xff] %v2837
                %v2839 = vld [vmem:[%s2675 + $0x288] sm:$0xff]
                %2840 = vst [vmem:[%s2676 + $0x508] sm:$0xff] %v2839
                %v2841 = vld [vmem:[%s2675 + $0x290] sm:$0xff]
                %2842 = vst [vmem:[%s2676 + $0x510] sm:$0xff] %v2841
                %v2843 = vld [vmem:[%s2675 + $0x298] sm:$0xff]
                %2844 = vst [vmem:[%s2676 + $0x518] sm:$0xff] %v2843
                %v2845 = vld [vmem:[%s2675 + $0x2a0] sm:$0xff]
                %2846 = vst [vmem:[%s2676 + $0x520] sm:$0xff] %v2845
                %v2847 = vld [vmem:[%s2675 + $0x2a8] sm:$0xff]
                %2848 = vst [vmem:[%s2676 + $0x528] sm:$0xff] %v2847
                %v2849 = vld [vmem:[%s2675 + $0x2b0] sm:$0xff]
                %2850 = vst [vmem:[%s2676 + $0x530] sm:$0xff] %v2849
                %v2851 = vld [vmem:[%s2675 + $0x2b8] sm:$0xff]
                %2852 = vst [vmem:[%s2676 + $0x538] sm:$0xff] %v2851
                %v2853 = vld [vmem:[%s2675 + $0x2c0] sm:$0xff]
                %2854 = vst [vmem:[%s2676 + $0x540] sm:$0xff] %v2853
                %v2855 = vld [vmem:[%s2675 + $0x2c8] sm:$0xff]
                %2856 = vst [vmem:[%s2676 + $0x548] sm:$0xff] %v2855
                %v2857 = vld [vmem:[%s2675 + $0x2d0] sm:$0xff]
                %2858 = vst [vmem:[%s2676 + $0x550] sm:$0xff] %v2857
                %v2859 = vld [vmem:[%s2675 + $0x2d8] sm:$0xff]
                %2860 = vst [vmem:[%s2676 + $0x558] sm:$0xff] %v2859
                %v2861 = vld [vmem:[%s2675 + $0x2e0] sm:$0xff]
                %2862 = vst [vmem:[%s2676 + $0x560] sm:$0xff] %v2861
                %v2863 = vld [vmem:[%s2675 + $0x2e8] sm:$0xff]
                %2864 = vst [vmem:[%s2676 + $0x568] sm:$0xff] %v2863
                %v2865 = vld [vmem:[%s2675 + $0x2f0] sm:$0xff]
                %2866 = vst [vmem:[%s2676 + $0x570] sm:$0xff] %v2865
                %v2867 = vld [vmem:[%s2675 + $0x2f8] sm:$0xff]
                %2868 = vst [vmem:[%s2676 + $0x578] sm:$0xff] %v2867
                %v2869 = vld [vmem:[%s2675 + $0x300] sm:$0xff]
                %2870 = vst [vmem:[%s2676 + $0x600] sm:$0xff] %v2869
                %v2871 = vld [vmem:[%s2675 + $0x308] sm:$0xff]
                %2872 = vst [vmem:[%s2676 + $0x608] sm:$0xff] %v2871
                %v2873 = vld [vmem:[%s2675 + $0x310] sm:$0xff]
                %2874 = vst [vmem:[%s2676 + $0x610] sm:$0xff] %v2873
                %v2875 = vld [vmem:[%s2675 + $0x318] sm:$0xff]
                %2876 = vst [vmem:[%s2676 + $0x618] sm:$0xff] %v2875
                %v2877 = vld [vmem:[%s2675 + $0x320] sm:$0xff]
                %2878 = vst [vmem:[%s2676 + $0x620] sm:$0xff] %v2877
                %v2879 = vld [vmem:[%s2675 + $0x328] sm:$0xff]
                %2880 = vst [vmem:[%s2676 + $0x628] sm:$0xff] %v2879
                %v2881 = vld [vmem:[%s2675 + $0x330] sm:$0xff]
                %2882 = vst [vmem:[%s2676 + $0x630] sm:$0xff] %v2881
                %v2883 = vld [vmem:[%s2675 + $0x338] sm:$0xff]
                %2884 = vst [vmem:[%s2676 + $0x638] sm:$0xff] %v2883
                %v2885 = vld [vmem:[%s2675 + $0x340] sm:$0xff]
                %2886 = vst [vmem:[%s2676 + $0x640] sm:$0xff] %v2885
                %v2887 = vld [vmem:[%s2675 + $0x348] sm:$0xff]
                %2888 = vst [vmem:[%s2676 + $0x648] sm:$0xff] %v2887
                %v2889 = vld [vmem:[%s2675 + $0x350] sm:$0xff]
                %2890 = vst [vmem:[%s2676 + $0x650] sm:$0xff] %v2889
                %v2891 = vld [vmem:[%s2675 + $0x358] sm:$0xff]
                %2892 = vst [vmem:[%s2676 + $0x658] sm:$0xff] %v2891
                %v2893 = vld [vmem:[%s2675 + $0x360] sm:$0xff]
                %2894 = vst [vmem:[%s2676 + $0x660] sm:$0xff] %v2893
                %v2895 = vld [vmem:[%s2675 + $0x368] sm:$0xff]
                %2896 = vst [vmem:[%s2676 + $0x668] sm:$0xff] %v2895
                %v2897 = vld [vmem:[%s2675 + $0x370] sm:$0xff]
                %2898 = vst [vmem:[%s2676 + $0x670] sm:$0xff] %v2897
                %v2899 = vld [vmem:[%s2675 + $0x378] sm:$0xff]
                %2900 = vst [vmem:[%s2676 + $0x678] sm:$0xff] %v2899
                %v2901 = vld [vmem:[%s2675 + $0x380] sm:$0xff]
                %2902 = vst [vmem:[%s2676 + $0x700] sm:$0xff] %v2901
                %v2903 = vld [vmem:[%s2675 + $0x388] sm:$0xff]
                %2904 = vst [vmem:[%s2676 + $0x708] sm:$0xff] %v2903
                %v2905 = vld [vmem:[%s2675 + $0x390] sm:$0xff]
                %2906 = vst [vmem:[%s2676 + $0x710] sm:$0xff] %v2905
                %v2907 = vld [vmem:[%s2675 + $0x398] sm:$0xff]
                %2908 = vst [vmem:[%s2676 + $0x718] sm:$0xff] %v2907
                %v2909 = vld [vmem:[%s2675 + $0x3a0] sm:$0xff]
                %2910 = vst [vmem:[%s2676 + $0x720] sm:$0xff] %v2909
                %v2911 = vld [vmem:[%s2675 + $0x3a8] sm:$0xff]
                %2912 = vst [vmem:[%s2676 + $0x728] sm:$0xff] %v2911
                %v2913 = vld [vmem:[%s2675 + $0x3b0] sm:$0xff]
                %2914 = vst [vmem:[%s2676 + $0x730] sm:$0xff] %v2913
                %v2915 = vld [vmem:[%s2675 + $0x3b8] sm:$0xff]
                %2916 = vst [vmem:[%s2676 + $0x738] sm:$0xff] %v2915
                %v2917 = vld [vmem:[%s2675 + $0x3c0] sm:$0xff]
                %2918 = vst [vmem:[%s2676 + $0x740] sm:$0xff] %v2917
                %v2919 = vld [vmem:[%s2675 + $0x3c8] sm:$0xff]
                %2920 = vst [vmem:[%s2676 + $0x748] sm:$0xff] %v2919
                %v2921 = vld [vmem:[%s2675 + $0x3d0] sm:$0xff]
                %2922 = vst [vmem:[%s2676 + $0x750] sm:$0xff] %v2921
                %v2923 = vld [vmem:[%s2675 + $0x3d8] sm:$0xff]
                %2924 = vst [vmem:[%s2676 + $0x758] sm:$0xff] %v2923
                %v2925 = vld [vmem:[%s2675 + $0x3e0] sm:$0xff]
                %2926 = vst [vmem:[%s2676 + $0x760] sm:$0xff] %v2925
                %v2927 = vld [vmem:[%s2675 + $0x3e8] sm:$0xff]
                %2928 = vst [vmem:[%s2676 + $0x768] sm:$0xff] %v2927
                %v2929 = vld [vmem:[%s2675 + $0x3f0] sm:$0xff]
                %2930 = vst [vmem:[%s2676 + $0x770] sm:$0xff] %v2929
                %v2931 = vld [vmem:[%s2675 + $0x3f8] sm:$0xff]
                %2932 = vst [vmem:[%s2676 + $0x778] sm:$0xff] %v2931
              $region49: #{model_forward.2} parent=43 // loop_footer
                %s2674 = sadd.s32 1, %s2670
              $region50: #{model_forward.2} parent=43 // loop_footer_branch
                %2669 = sbr.rel target = $region46
              $region51: #{model_forward.2} parent=43 // loop_exit
                _
            $region44: #{model_forward.2} parent=39 // pred_fallthru
              _
            // Predicated region
            $region52: #{model_forward.2} parent=39 // pred_check
              _
            $region53: #{model_forward.2} parent=39 // pred_check_branch
              %2934 = sbr.rel target = $region55
            $region54: #{model_forward.2} parent=39 // pred_region
              _
            $region55: #{model_forward.2} parent=39 // pred_fallthru
              _
          $region40: #{model_forward.2} parent=35 // pred_fallthru
            _
          %2935 = vnop
        $region36: #{model_forward.2} parent=31 // pred_fallthru
          _
      $region32: #{model_forward.2} parent=5 // pred_fallthru
        _
      %p2936 = scmp.le.s32.totalorder 2, %s9
      // Predicated region
      $region56: #{model_forward.2} parent=5 // pred_check
        %p2937 = pneg %p2936
      $region57: #{model_forward.2} parent=5 // pred_check_branch
        %2939 = sbr.rel (%p2937) target = $region59
      $region58: #{model_forward.2} parent=5 // pred_region
        %s2940 = ssub.s32 %s9, 2
        // Predicated region
        $region60: #{model_forward.2} parent=58 // pred_check
          %p2941 = pneg %p106
        $region61: #{model_forward.2} parent=58 // pred_check_branch
          %2943 = sbr.rel (%p2941) target = $region63
        $region62: #{model_forward.2} parent=58 // pred_region
          %s2944 = sand.u32 %s91, 1
          %s2945 = sand.u32 %s91, 1
          %s2946 = smul.addr %s2945, 1024
          %s2947 = scalar_lea.vmem [#allocation2], %s2946
        $region63: #{model_forward.2} parent=58 // pred_fallthru
          _
      $region59: #{model_forward.2} parent=5 // pred_fallthru
        _
    $region6: #{model_forward.2} parent=1 // loop_footer
      %s13 = sadd.s32 1, %s9
    $region7: #{model_forward.2} parent=1 // loop_footer_branch
      %8 = sbr.rel target = $region3
    $region8: #{model_forward.2} parent=1 // loop_exit
      _

</llo_original>
